<compile_context>
chip_gen: v5e
topology: v5e:2x2
jax: 0.10.0
libtpu: 0.0.40
codegen_flags: <defaults>
</compile_context>

<pallas_src>
import math
import functools

import jax
import jax.numpy as jnp
from jax import lax
from jax.experimental import pallas as pl
from jax.experimental.pallas import tpu as pltpu


def _slab_offsets(BS, E, e2):
    """Row offsets inside the coalesced (rows, 128) small-constant slab."""
    r_mask = BS                                   # additive block-diag causal mask (BS rows)
    r_vec = 2 * BS                                # ln1_w, ln1_b, ln2_w, ln2_b, b2, attn_out_b
    r_l1 = -(-(r_vec + 6) // 8) * 8               # layer_1 weight (E rows), 8-aligned
    r_l2 = -(-(r_l1 + E) // 8) * 8                # layer_2 weight (E/2 rows), 8-aligned
    r_hb = r_l2 + e2                              # l1_b, l2_b, dec_w, dec_b (4 rows)
    n_rows = -(-(r_hb + 4) // 8) * 8
    return r_mask, r_vec, r_l1, r_l2, r_hb, n_rows


def _transformer_kernel(x_ref, slab_ref, wattn_ref, w1_hbm, w2_hbm, b1_ref,
                        o_ref, w1_vmem, w2_vmem, dma_sem,
                        *, bs, e, e2, e4, nhead, dh,
                        r_mask, r_vec, r_l1, r_l2, r_hb):
    f32 = jnp.float32

    # Kick off the big FFN-weight fetches now; they complete under the attention math below.
    cp1 = pltpu.make_async_copy(w1_hbm, w1_vmem, dma_sem.at[0])
    cp2 = pltpu.make_async_copy(w2_hbm, w2_vmem, dma_sem.at[1])
    cp1.start()
    cp2.start()

    x = x_ref[...] + slab_ref[0:bs, 0:e]                      # + positional encoding

    def layernorm(a, w, b, eps=1e-5):
        mu = jnp.mean(a, axis=-1, keepdims=True)
        ac = a - mu
        var = jnp.mean(ac * ac, axis=-1, keepdims=True)
        return ac * lax.rsqrt(var + eps) * w + b

    def rdot(a, b):                                           # contract last dims (rhs "transposed")
        return lax.dot_general(a, b, (((1,), (1,)), ((), ())),
                               preferred_element_type=f32)

    # ---- multi-head self-attention ----
    # Q | K | (V @ out_proj) projections as ONE lane-dense matmul (bias packed in last row).
    qkv = jnp.dot(x, wattn_ref[0:e, :], preferred_element_type=f32)
    qkv = qkv + wattn_ref[e:e + 1, :]                         # (bq*scale | bk | bv @ Wo)
    nq = nhead * dh
    mask = slab_ref[r_mask:r_mask + bs, 0:bs]                 # additive block-diag causal mask

    # Per-head QK^T + softmax (inherently per-head; tiny, overlapped with the FFN weight DMA).
    # Probabilities are emitted directly in (BS, H*BS) layout so the head-summed P.V is ONE matmul.
    p_blocks = []
    for h in range(nhead):
        q_h = qkv[:, h * dh:(h + 1) * dh]                     # (BS, dh), 1/sqrt(dh) folded
        k_h = qkv[:, nq + h * dh:nq + (h + 1) * dh]           # (BS, dh)
        s_h = rdot(q_h, k_h) + mask                           # (BS, BS)
        s_h = s_h - jnp.max(s_h, axis=-1, keepdims=True)
        e_h = jnp.exp(s_h)
        p_blocks.append(e_h * pl.reciprocal(jnp.sum(e_h, axis=-1, keepdims=True),
                                            approx=True))
    p_flat = jnp.concatenate(p_blocks, axis=1)                # (BS, H*BS)
    v_flat = jnp.concatenate(
        [qkv[:, 2 * nq + h * e:2 * nq + (h + 1) * e] for h in range(nhead)],
        axis=0)                                               # (H*BS, E), V@Wo fused
    attn = jnp.dot(p_flat, v_flat, preferred_element_type=f32)
    attn = attn + slab_ref[r_vec + 5:r_vec + 6, 0:e]          # attention out-proj bias

    # TODO(synk): dropout layers are identity here (eval-mode semantics).
    # ---- post-norm encoder layer ----
    x1 = layernorm(x + attn,
                   slab_ref[r_vec:r_vec + 1, 0:e],
                   slab_ref[r_vec + 1:r_vec + 2, 0:e])

    cp1.wait()                                                # FFN weight 1 now resident
    ff = jnp.dot(x1.astype(jnp.bfloat16), w1_vmem[...],
                 preferred_element_type=f32) + b1_ref[...]
    ff = jnp.maximum(ff, 0.0)                                 # (BS, F)
    cp2.wait()                                                # FFN weight 2 now resident
    ff = rdot(ff.astype(jnp.bfloat16), w2_vmem[...])          # w2 kept lane-dense (E, F)
    ff = ff + slab_ref[r_vec + 4:r_vec + 5, 0:e]              # b2
    x2 = layernorm(x1 + ff,
                   slab_ref[r_vec + 2:r_vec + 3, 0:e],
                   slab_ref[r_vec + 3:r_vec + 4, 0:e])

    # ---- regression head ----
    h1 = jnp.dot(x2, slab_ref[r_l1:r_l1 + e, 0:e2], preferred_element_type=f32)
    h1 = jnp.maximum(h1 + slab_ref[r_hb:r_hb + 1, 0:e2], 0.0)       # (BS, E/2)
    h2 = jnp.dot(h1, slab_ref[r_l2:r_l2 + e2, 0:e4], preferred_element_type=f32)
    h2 = jnp.maximum(h2 + slab_ref[r_hb + 1:r_hb + 2, 0:e4], 0.0)   # (BS, E/4)
    dec = jnp.sum(h2 * slab_ref[r_hb + 2:r_hb + 3, 0:e4], axis=-1, keepdims=True)
    o_ref[...] = dec + slab_ref[r_hb + 3:r_hb + 4, 0:1]             # (BS, 1)


def transformer_forward(src, kp, *, nhead=10):
    S, B, E = src.shape
    BS = B * S
    e2, e4 = E // 2, E // 4
    dh = E // nhead
    F = kp["w1t"].shape[1]
    r_mask, r_vec, r_l1, r_l2, r_hb, _ = _slab_offsets(BS, E, e2)

    x = jnp.transpose(src, (1, 0, 2)).reshape(BS, E).astype(jnp.float32)
    args = (x, kp["slab"], kp["wattn"], kp["w1t"], kp["w2"], kp["b1"])

    flops = (2 * BS * E * (2 * E + nhead * E)      # fused q/k/(v@Wo) projection
             + 2 * nhead * BS * BS * dh            # per-head q.k^T
             + 2 * BS * nhead * BS * E             # fused P.V
             + 4 * BS * E * F                      # FFN
             + 2 * BS * (E * e2 + e2 * e4 + e4))   # regression head
    cost = pl.CostEstimate(
        flops=flops,
        transcendentals=nhead * BS * BS + 4 * BS,
        bytes_accessed=int(sum(int(a.size) * a.dtype.itemsize for a in args) + 4 * BS))

    vmem = pltpu.MemorySpace.VMEM
    out = pl.pallas_call(
        functools.partial(_transformer_kernel, bs=BS, e=E, e2=e2, e4=e4,
                          nhead=nhead, dh=dh, r_mask=r_mask, r_vec=r_vec,
                          r_l1=r_l1, r_l2=r_l2, r_hb=r_hb),
        out_shape=jax.ShapeDtypeStruct((BS, 1), jnp.float32),
        in_specs=[pl.BlockSpec(memory_space=vmem),      # x
                  pl.BlockSpec(memory_space=vmem),      # small-constant slab
                  pl.BlockSpec(memory_space=vmem),      # packed attention weights
                  pl.BlockSpec(memory_space=pl.ANY),    # w1^T stays in HBM, manual DMA
                  pl.BlockSpec(memory_space=pl.ANY),    # w2 stays in HBM, manual DMA
                  pl.BlockSpec(memory_space=vmem)],     # b1
        out_specs=pl.BlockSpec(memory_space=vmem),
        scratch_shapes=[pltpu.VMEM((E, F), jnp.bfloat16),
                        pltpu.VMEM((E, F), jnp.bfloat16),
                        pltpu.SemaphoreType.DMA((2,))],
        cost_estimate=cost,
    )(*args)
    return jnp.transpose(out.reshape(B, S, 1), (1, 0, 2))    # (S, B, 1)


def make_positional_encoding(S, E):
    pos = jnp.arange(S, dtype=jnp.float32)[:, None]
    div = jnp.exp(jnp.arange(0, E, 2, dtype=jnp.float32) * (-math.log(10000.0) / E))
    pe = jnp.zeros((S, E), jnp.float32)
    pe = pe.at[:, 0::2].set(jnp.sin(pos * div))
    pe = pe.at[:, 1::2].set(jnp.cos(pos * div))
    return pe


def init_params(key, S, E, d_ff):
    """Parameters in PyTorch layout (Linear weights are (out, in), 1-D biases)."""
    e2, e4 = E // 2, E // 4
    ks = jax.random.split(key, 14)

    def u(k, shape, scale=0.1):
        return jax.random.uniform(k, shape, jnp.float32, -scale, scale)

    return {
        "pe":    make_positional_encoding(S, E),
        "in_w":  u(ks[0], (3 * E, E)),
        "in_b":  u(ks[1], (3 * E,)),
        "out_w": u(ks[2], (E, E)),
        "out_b": u(ks[3], (E,)),
        "ln1_w": jnp.ones((E,), jnp.float32),
        "ln1_b": jnp.zeros((E,), jnp.float32),
        "ln2_w": jnp.ones((E,), jnp.float32),
        "ln2_b": jnp.zeros((E,), jnp.float32),
        "w1":    u(ks[4], (d_ff, E)),
        "b1":    u(ks[5], (d_ff,)),
        "w2":    u(ks[6], (E, d_ff)),
        "b2":    u(ks[7], (E,)),
        "l1_w":  u(ks[8], (e2, E)),
        "l1_b":  u(ks[9], (e2,)),
        "l2_w":  u(ks[10], (e4, e2)),
        "l2_b":  u(ks[11], (e4,)),
        # decoder: init_weights() -> uniform(-0.1, 0.1) weight, zero bias
        "dec_w": u(ks[12], (1, e4)),
        "dec_b": jnp.zeros((1,), jnp.float32),
    }


def pack_params(p, *, B, S, nhead):
    """Host-side, one-time re-layout: lane-dense packed weights + one coalesced constant slab."""
    E = p["out_w"].shape[0]
    dh = E // nhead
    e2, e4 = E // 2, E // 4
    BS = B * S
    scale = 1.0 / math.sqrt(dh)
    f32 = jnp.float32

    in_w, in_b = p["in_w"], p["in_b"]
    wq, wk, wv = in_w[:E], in_w[E:2 * E], in_w[2 * E:]
    bq, bk, bv = in_b[:E], in_b[E:2 * E], in_b[2 * E:]
    out_w, out_b = p["out_w"], p["out_b"]

    # fused per-head (V @ out_proj) weights, flattened lane-dense to (E, H*E)
    wv_r = wv.reshape(nhead, dh, E)                 # [h, d, e_in]
    wo_r = out_w.T.reshape(nhead, dh, E)            # [h, d, e_out]
    wvo = jnp.einsum("hde,hdf->hef", wv_r, wo_r)    # (H, E_in, E_out)
    wvo_flat = wvo.transpose(1, 0, 2).reshape(E, nhead * E)
    bvo_flat = jnp.einsum("hd,hdf->hf", bv.reshape(nhead, dh), wo_r).reshape(-1)

    # packed attention weights: rows 0:E weights, row E bias; 1/sqrt(dh) folded into Q
    w_rows = jnp.concatenate([wq.T * scale, wk.T, wvo_flat], axis=1)       # (E, 2E+H*E)
    b_rows = jnp.concatenate([bq * scale, bk, bvo_flat])[None, :]          # (1, 2E+H*E)
    wattn = jnp.concatenate([w_rows, b_rows], axis=0).astype(f32)          # (E+1, 2E+H*E)

    # ---- coalesced small-constant slab (rows, 128) ----
    W = 128
    assert max(E, BS, e2) <= W, "slab packing assumes E, B*S, E/2 <= 128"
    r_mask, r_vec, r_l1, r_l2, r_hb, n_rows = _slab_offsets(BS, E, e2)

    pe = jnp.tile(p["pe"], (B, 1))                  # rows are batch-major (b*S + s)
    rr = jnp.arange(BS)
    allowed = (rr[:, None] // S == rr[None, :] // S) & (rr[None, :] <= rr[:, None])
    mask = jnp.where(allowed, 0.0, -1e30).astype(f32)

    slab = jnp.zeros((n_rows, W), f32)
    slab = slab.at[0:BS, 0:E].set(pe)
    slab = slab.at[r_mask:r_mask + BS, 0:BS].set(mask)
    vec_rows = jnp.stack([p["ln1_w"], p["ln1_b"], p["ln2_w"], p["ln2_b"], p["b2"], out_b])
    slab = slab.at[r_vec:r_vec + 6, 0:E].set(vec_rows)
    slab = slab.at[r_l1:r_l1 + E, 0:e2].set(p["l1_w"].T)
    slab = slab.at[r_l2:r_l2 + e2, 0:e4].set(p["l2_w"].T)
    slab = slab.at[r_hb, 0:e2].set(p["l1_b"])
    slab = slab.at[r_hb + 1, 0:e4].set(p["l2_b"])
    slab = slab.at[r_hb + 2, 0:e4].set(p["dec_w"][0])
    slab = slab.at[r_hb + 3, 0:1].set(p["dec_b"])

    return {
        "slab":  slab,
        "wattn": wattn,
        "w1t":   p["w1"].T.astype(jnp.bfloat16),    # (E, F) lane-dense
        "w2":    p["w2"].astype(jnp.bfloat16),      # (E, F) lane-dense (PyTorch layout)
        "b1":    p["b1"].reshape(1, -1).astype(f32),
    }


if __name__ == "__main__":
    # Small shapes: seq=8, batch=2, feature_size=40 (divisible by nhead=10),
    # dim_feedforward=2048 (nn.TransformerEncoderLayer default).
    S, B, E, H, F = 8, 2, 40, 10, 2048

    key = jax.random.PRNGKey(0)
    pkey, xkey = jax.random.split(key)
    params = init_params(pkey, S, E, F)
    kparams = pack_params(params, B=B, S=S, nhead=H)          # one-time host re-layout
    src = jax.random.normal(xkey, (S, B, E), jnp.float32)     # (S, B, E) like PyTorch

    out = transformer_forward(src, kparams, nhead=H)
    out = jax.block_until_ready(out)
    assert out.shape == (S, B, 1), out.shape
    assert bool(jnp.all(jnp.isfinite(out)))
    print("KERNEL_OK")
</pallas_src>

<mosaic_0001>
module attributes {stable_mosaic.version = 11 : i64} {
  func.func @_transformer_kernel(%arg0: memref<16x40xf32, #tpu.memory_space<vmem>>, %arg1: memref<104x128xf32, #tpu.memory_space<vmem>>, %arg2: memref<41x480xf32, #tpu.memory_space<vmem>>, %arg3: memref<40x2048xbf16, #tpu.memory_space<any>>, %arg4: memref<40x2048xbf16, #tpu.memory_space<any>>, %arg5: memref<1x2048xf32, #tpu.memory_space<vmem>>, %arg6: memref<16x1xf32, #tpu.memory_space<vmem>>, %arg7: memref<40x2048xbf16, #tpu.memory_space<vmem>>, %arg8: memref<40x2048xbf16, #tpu.memory_space<vmem>>, %arg9: memref<2x!tpu.dma_semaphore, #tpu.memory_space<semaphore_mem>>) attributes {dimension_semantics = [], scalar_prefetch = 0 : i64, scratch_operands = 3 : i64, tpu.core_type = #tpu.core_type<tc>} {
    %c0_i32 = arith.constant 0 : i32
    %0 = tpu.memref_slice %arg9[%c0_i32] : memref<2x!tpu.dma_semaphore, #tpu.memory_space<semaphore_mem>> -> memref<1x!tpu.dma_semaphore, #tpu.memory_space<semaphore_mem>>
    %1 = tpu.memref_squeeze %0 : memref<1x!tpu.dma_semaphore, #tpu.memory_space<semaphore_mem>> -> memref<!tpu.dma_semaphore, #tpu.memory_space<semaphore_mem>>
    tpu.enqueue_dma source(%arg3 : memref<40x2048xbf16, #tpu.memory_space<any>>) target(%arg7 : memref<40x2048xbf16, #tpu.memory_space<vmem>>) target_semaphore(%1 : memref<!tpu.dma_semaphore, #tpu.memory_space<semaphore_mem>>)
    %c1_i32 = arith.constant 1 : i32
    %2 = tpu.memref_slice %arg9[%c1_i32] : memref<2x!tpu.dma_semaphore, #tpu.memory_space<semaphore_mem>> -> memref<1x!tpu.dma_semaphore, #tpu.memory_space<semaphore_mem>>
    %3 = tpu.memref_squeeze %2 : memref<1x!tpu.dma_semaphore, #tpu.memory_space<semaphore_mem>> -> memref<!tpu.dma_semaphore, #tpu.memory_space<semaphore_mem>>
    tpu.enqueue_dma source(%arg4 : memref<40x2048xbf16, #tpu.memory_space<any>>) target(%arg8 : memref<40x2048xbf16, #tpu.memory_space<vmem>>) target_semaphore(%3 : memref<!tpu.dma_semaphore, #tpu.memory_space<semaphore_mem>>)
    %c0 = arith.constant 0 : index
    %c0_0 = arith.constant 0 : index
    %4 = vector.load %arg0[%c0, %c0_0] : memref<16x40xf32, #tpu.memory_space<vmem>>, vector<16x40xf32>
    %c0_1 = arith.constant 0 : index
    %c0_2 = arith.constant 0 : index
    %5 = vector.load %arg1[%c0_1, %c0_2] : memref<104x128xf32, #tpu.memory_space<vmem>>, vector<16x40xf32>
    %6 = arith.addf %4, %5 : vector<16x40xf32>
    %c0_3 = arith.constant 0 : index
    %c0_4 = arith.constant 0 : index
    %7 = vector.load %arg2[%c0_3, %c0_4] : memref<41x480xf32, #tpu.memory_space<vmem>>, vector<40x480xf32>
    %cst = arith.constant dense<0.000000e+00> : vector<16x480xf32>
    %8 = tpu.matmul %6, %7, %cst {dimension_numbers = #tpu.dot_dimension_numbers<[1], [0], [0], [1], [0, 0, 1, 1], [], []>} : vector<16x40xf32>, vector<40x480xf32>, vector<16x480xf32> -> vector<16x480xf32>
    %c40 = arith.constant 40 : index
    %c0_5 = arith.constant 0 : index
    %9 = vector.load %arg2[%c40, %c0_5] : memref<41x480xf32, #tpu.memory_space<vmem>>, vector<1x480xf32>
    %10 = vector.broadcast %9 : vector<1x480xf32> to vector<16x480xf32>
    %11 = arith.addf %8, %10 : vector<16x480xf32>
    %c16 = arith.constant 16 : index
    %c0_6 = arith.constant 0 : index
    %12 = vector.load %arg1[%c16, %c0_6] : memref<104x128xf32, #tpu.memory_space<vmem>>, vector<16x16xf32>
    %13 = vector.extract_strided_slice %11 {offsets = [0, 0], sizes = [16, 4], strides = [1, 1]} : vector<16x480xf32> to vector<16x4xf32>
    %14 = vector.extract_strided_slice %11 {offsets = [0, 40], sizes = [16, 4], strides = [1, 1]} : vector<16x480xf32> to vector<16x4xf32>
    %cst_7 = arith.constant dense<0.000000e+00> : vector<16x16xf32>
    %15 = tpu.matmul %13, %14, %cst_7 {dimension_numbers = #tpu.dot_dimension_numbers<[1], [1], [0], [0], [0, 0, 1, 0], [], []>} : vector<16x4xf32>, vector<16x4xf32>, vector<16x16xf32> -> vector<16x16xf32>
    %16 = arith.addf %15, %12 : vector<16x16xf32>
    %cst_8 = arith.constant dense<0xFF800000> : vector<16xf32>
    %17 = vector.multi_reduction <maximumf>, %16, %cst_8 [1] : vector<16x16xf32> to vector<16xf32>
    %18 = vector.shape_cast %17 : vector<16xf32> to vector<16x1xf32>
    %19 = vector.broadcast %18 : vector<16x1xf32> to vector<16x16xf32>
    %20 = arith.subf %16, %19 : vector<16x16xf32>
    %21 = math.exp %20 : vector<16x16xf32>
    %cst_9 = arith.constant dense<0.000000e+00> : vector<16xf32>
    %22 = vector.multi_reduction <add>, %21, %cst_9 [1] : vector<16x16xf32> to vector<16xf32>
    %23 = vector.shape_cast %22 : vector<16xf32> to vector<16x1xf32>
    %24 = tpu.reciprocal %23 {approx = true} : vector<16x1xf32> -> vector<16x1xf32>
    %25 = vector.broadcast %24 : vector<16x1xf32> to vector<16x16xf32>
    %26 = arith.mulf %21, %25 : vector<16x16xf32>
    %27 = vector.extract_strided_slice %11 {offsets = [0, 4], sizes = [16, 4], strides = [1, 1]} : vector<16x480xf32> to vector<16x4xf32>
    %28 = vector.extract_strided_slice %11 {offsets = [0, 44], sizes = [16, 4], strides = [1, 1]} : vector<16x480xf32> to vector<16x4xf32>
    %cst_10 = arith.constant dense<0.000000e+00> : vector<16x16xf32>
    %29 = tpu.matmul %27, %28, %cst_10 {dimension_numbers = #tpu.dot_dimension_numbers<[1], [1], [0], [0], [0, 0, 1, 0], [], []>} : vector<16x4xf32>, vector<16x4xf32>, vector<16x16xf32> -> vector<16x16xf32>
    %30 = arith.addf %29, %12 : vector<16x16xf32>
    %cst_11 = arith.constant dense<0xFF800000> : vector<16xf32>
    %31 = vector.multi_reduction <maximumf>, %30, %cst_11 [1] : vector<16x16xf32> to vector<16xf32>
    %32 = vector.shape_cast %31 : vector<16xf32> to vector<16x1xf32>
    %33 = vector.broadcast %32 : vector<16x1xf32> to vector<16x16xf32>
    %34 = arith.subf %30, %33 : vector<16x16xf32>
    %35 = math.exp %34 : vector<16x16xf32>
    %cst_12 = arith.constant dense<0.000000e+00> : vector<16xf32>
    %36 = vector.multi_reduction <add>, %35, %cst_12 [1] : vector<16x16xf32> to vector<16xf32>
    %37 = vector.shape_cast %36 : vector<16xf32> to vector<16x1xf32>
    %38 = tpu.reciprocal %37 {approx = true} : vector<16x1xf32> -> vector<16x1xf32>
    %39 = vector.broadcast %38 : vector<16x1xf32> to vector<16x16xf32>
    %40 = arith.mulf %35, %39 : vector<16x16xf32>
    %41 = vector.extract_strided_slice %11 {offsets = [0, 8], sizes = [16, 4], strides = [1, 1]} : vector<16x480xf32> to vector<16x4xf32>
    %42 = vector.extract_strided_slice %11 {offsets = [0, 48], sizes = [16, 4], strides = [1, 1]} : vector<16x480xf32> to vector<16x4xf32>
    %cst_13 = arith.constant dense<0.000000e+00> : vector<16x16xf32>
    %43 = tpu.matmul %41, %42, %cst_13 {dimension_numbers = #tpu.dot_dimension_numbers<[1], [1], [0], [0], [0, 0, 1, 0], [], []>} : vector<16x4xf32>, vector<16x4xf32>, vector<16x16xf32> -> vector<16x16xf32>
    %44 = arith.addf %43, %12 : vector<16x16xf32>
    %cst_14 = arith.constant dense<0xFF800000> : vector<16xf32>
    %45 = vector.multi_reduction <maximumf>, %44, %cst_14 [1] : vector<16x16xf32> to vector<16xf32>
    %46 = vector.shape_cast %45 : vector<16xf32> to vector<16x1xf32>
    %47 = vector.broadcast %46 : vector<16x1xf32> to vector<16x16xf32>
    %48 = arith.subf %44, %47 : vector<16x16xf32>
    %49 = math.exp %48 : vector<16x16xf32>
    %cst_15 = arith.constant dense<0.000000e+00> : vector<16xf32>
    %50 = vector.multi_reduction <add>, %49, %cst_15 [1] : vector<16x16xf32> to vector<16xf32>
    %51 = vector.shape_cast %50 : vector<16xf32> to vector<16x1xf32>
    %52 = tpu.reciprocal %51 {approx = true} : vector<16x1xf32> -> vector<16x1xf32>
    %53 = vector.broadcast %52 : vector<16x1xf32> to vector<16x16xf32>
    %54 = arith.mulf %49, %53 : vector<16x16xf32>
    %55 = vector.extract_strided_slice %11 {offsets = [0, 12], sizes = [16, 4], strides = [1, 1]} : vector<16x480xf32> to vector<16x4xf32>
    %56 = vector.extract_strided_slice %11 {offsets = [0, 52], sizes = [16, 4], strides = [1, 1]} : vector<16x480xf32> to vector<16x4xf32>
    %cst_16 = arith.constant dense<0.000000e+00> : vector<16x16xf32>
    %57 = tpu.matmul %55, %56, %cst_16 {dimension_numbers = #tpu.dot_dimension_numbers<[1], [1], [0], [0], [0, 0, 1, 0], [], []>} : vector<16x4xf32>, vector<16x4xf32>, vector<16x16xf32> -> vector<16x16xf32>
    %58 = arith.addf %57, %12 : vector<16x16xf32>
    %cst_17 = arith.constant dense<0xFF800000> : vector<16xf32>
    %59 = vector.multi_reduction <maximumf>, %58, %cst_17 [1] : vector<16x16xf32> to vector<16xf32>
    %60 = vector.shape_cast %59 : vector<16xf32> to vector<16x1xf32>
    %61 = vector.broadcast %60 : vector<16x1xf32> to vector<16x16xf32>
    %62 = arith.subf %58, %61 : vector<16x16xf32>
    %63 = math.exp %62 : vector<16x16xf32>
    %cst_18 = arith.constant dense<0.000000e+00> : vector<16xf32>
    %64 = vector.multi_reduction <add>, %63, %cst_18 [1] : vector<16x16xf32> to vector<16xf32>
    %65 = vector.shape_cast %64 : vector<16xf32> to vector<16x1xf32>
    %66 = tpu.reciprocal %65 {approx = true} : vector<16x1xf32> -> vector<16x1xf32>
    %67 = vector.broadcast %66 : vector<16x1xf32> to vector<16x16xf32>
    %68 = arith.mulf %63, %67 : vector<16x16xf32>
    %69 = vector.extract_strided_slice %11 {offsets = [0, 16], sizes = [16, 4], strides = [1, 1]} : vector<16x480xf32> to vector<16x4xf32>
    %70 = vector.extract_strided_slice %11 {offsets = [0, 56], sizes = [16, 4], strides = [1, 1]} : vector<16x480xf32> to vector<16x4xf32>
    %cst_19 = arith.constant dense<0.000000e+00> : vector<16x16xf32>
    %71 = tpu.matmul %69, %70, %cst_19 {dimension_numbers = #tpu.dot_dimension_numbers<[1], [1], [0], [0], [0, 0, 1, 0], [], []>} : vector<16x4xf32>, vector<16x4xf32>, vector<16x16xf32> -> vector<16x16xf32>
    %72 = arith.addf %71, %12 : vector<16x16xf32>
    %cst_20 = arith.constant dense<0xFF800000> : vector<16xf32>
    %73 = vector.multi_reduction <maximumf>, %72, %cst_20 [1] : vector<16x16xf32> to vector<16xf32>
    %74 = vector.shape_cast %73 : vector<16xf32> to vector<16x1xf32>
    %75 = vector.broadcast %74 : vector<16x1xf32> to vector<16x16xf32>
    %76 = arith.subf %72, %75 : vector<16x16xf32>
    %77 = math.exp %76 : vector<16x16xf32>
    %cst_21 = arith.constant dense<0.000000e+00> : vector<16xf32>
    %78 = vector.multi_reduction <add>, %77, %cst_21 [1] : vector<16x16xf32> to vector<16xf32>
    %79 = vector.shape_cast %78 : vector<16xf32> to vector<16x1xf32>
    %80 = tpu.reciprocal %79 {approx = true} : vector<16x1xf32> -> vector<16x1xf32>
    %81 = vector.broadcast %80 : vector<16x1xf32> to vector<16x16xf32>
    %82 = arith.mulf %77, %81 : vector<16x16xf32>
    %83 = vector.extract_strided_slice %11 {offsets = [0, 20], sizes = [16, 4], strides = [1, 1]} : vector<16x480xf32> to vector<16x4xf32>
    %84 = vector.extract_strided_slice %11 {offsets = [0, 60], sizes = [16, 4], strides = [1, 1]} : vector<16x480xf32> to vector<16x4xf32>
    %cst_22 = arith.constant dense<0.000000e+00> : vector<16x16xf32>
    %85 = tpu.matmul %83, %84, %cst_22 {dimension_numbers = #tpu.dot_dimension_numbers<[1], [1], [0], [0], [0, 0, 1, 0], [], []>} : vector<16x4xf32>, vector<16x4xf32>, vector<16x16xf32> -> vector<16x16xf32>
    %86 = arith.addf %85, %12 : vector<16x16xf32>
    %cst_23 = arith.constant dense<0xFF800000> : vector<16xf32>
    %87 = vector.multi_reduction <maximumf>, %86, %cst_23 [1] : vector<16x16xf32> to vector<16xf32>
    %88 = vector.shape_cast %87 : vector<16xf32> to vector<16x1xf32>
    %89 = vector.broadcast %88 : vector<16x1xf32> to vector<16x16xf32>
    %90 = arith.subf %86, %89 : vector<16x16xf32>
    %91 = math.exp %90 : vector<16x16xf32>
    %cst_24 = arith.constant dense<0.000000e+00> : vector<16xf32>
    %92 = vector.multi_reduction <add>, %91, %cst_24 [1] : vector<16x16xf32> to vector<16xf32>
    %93 = vector.shape_cast %92 : vector<16xf32> to vector<16x1xf32>
    %94 = tpu.reciprocal %93 {approx = true} : vector<16x1xf32> -> vector<16x1xf32>
    %95 = vector.broadcast %94 : vector<16x1xf32> to vector<16x16xf32>
    %96 = arith.mulf %91, %95 : vector<16x16xf32>
    %97 = vector.extract_strided_slice %11 {offsets = [0, 24], sizes = [16, 4], strides = [1, 1]} : vector<16x480xf32> to vector<16x4xf32>
    %98 = vector.extract_strided_slice %11 {offsets = [0, 64], sizes = [16, 4], strides = [1, 1]} : vector<16x480xf32> to vector<16x4xf32>
    %cst_25 = arith.constant dense<0.000000e+00> : vector<16x16xf32>
    %99 = tpu.matmul %97, %98, %cst_25 {dimension_numbers = #tpu.dot_dimension_numbers<[1], [1], [0], [0], [0, 0, 1, 0], [], []>} : vector<16x4xf32>, vector<16x4xf32>, vector<16x16xf32> -> vector<16x16xf32>
    %100 = arith.addf %99, %12 : vector<16x16xf32>
    %cst_26 = arith.constant dense<0xFF800000> : vector<16xf32>
    %101 = vector.multi_reduction <maximumf>, %100, %cst_26 [1] : vector<16x16xf32> to vector<16xf32>
    %102 = vector.shape_cast %101 : vector<16xf32> to vector<16x1xf32>
    %103 = vector.broadcast %102 : vector<16x1xf32> to vector<16x16xf32>
    %104 = arith.subf %100, %103 : vector<16x16xf32>
    %105 = math.exp %104 : vector<16x16xf32>
    %cst_27 = arith.constant dense<0.000000e+00> : vector<16xf32>
    %106 = vector.multi_reduction <add>, %105, %cst_27 [1] : vector<16x16xf32> to vector<16xf32>
    %107 = vector.shape_cast %106 : vector<16xf32> to vector<16x1xf32>
    %108 = tpu.reciprocal %107 {approx = true} : vector<16x1xf32> -> vector<16x1xf32>
    %109 = vector.broadcast %108 : vector<16x1xf32> to vector<16x16xf32>
    %110 = arith.mulf %105, %109 : vector<16x16xf32>
    %111 = vector.extract_strided_slice %11 {offsets = [0, 28], sizes = [16, 4], strides = [1, 1]} : vector<16x480xf32> to vector<16x4xf32>
    %112 = vector.extract_strided_slice %11 {offsets = [0, 68], sizes = [16, 4], strides = [1, 1]} : vector<16x480xf32> to vector<16x4xf32>
    %cst_28 = arith.constant dense<0.000000e+00> : vector<16x16xf32>
    %113 = tpu.matmul %111, %112, %cst_28 {dimension_numbers = #tpu.dot_dimension_numbers<[1], [1], [0], [0], [0, 0, 1, 0], [], []>} : vector<16x4xf32>, vector<16x4xf32>, vector<16x16xf32> -> vector<16x16xf32>
    %114 = arith.addf %113, %12 : vector<16x16xf32>
    %cst_29 = arith.constant dense<0xFF800000> : vector<16xf32>
    %115 = vector.multi_reduction <maximumf>, %114, %cst_29 [1] : vector<16x16xf32> to vector<16xf32>
    %116 = vector.shape_cast %115 : vector<16xf32> to vector<16x1xf32>
    %117 = vector.broadcast %116 : vector<16x1xf32> to vector<16x16xf32>
    %118 = arith.subf %114, %117 : vector<16x16xf32>
    %119 = math.exp %118 : vector<16x16xf32>
    %cst_30 = arith.constant dense<0.000000e+00> : vector<16xf32>
    %120 = vector.multi_reduction <add>, %119, %cst_30 [1] : vector<16x16xf32> to vector<16xf32>
    %121 = vector.shape_cast %120 : vector<16xf32> to vector<16x1xf32>
    %122 = tpu.reciprocal %121 {approx = true} : vector<16x1xf32> -> vector<16x1xf32>
    %123 = vector.broadcast %122 : vector<16x1xf32> to vector<16x16xf32>
    %124 = arith.mulf %119, %123 : vector<16x16xf32>
    %125 = vector.extract_strided_slice %11 {offsets = [0, 32], sizes = [16, 4], strides = [1, 1]} : vector<16x480xf32> to vector<16x4xf32>
    %126 = vector.extract_strided_slice %11 {offsets = [0, 72], sizes = [16, 4], strides = [1, 1]} : vector<16x480xf32> to vector<16x4xf32>
    %cst_31 = arith.constant dense<0.000000e+00> : vector<16x16xf32>
    %127 = tpu.matmul %125, %126, %cst_31 {dimension_numbers = #tpu.dot_dimension_numbers<[1], [1], [0], [0], [0, 0, 1, 0], [], []>} : vector<16x4xf32>, vector<16x4xf32>, vector<16x16xf32> -> vector<16x16xf32>
    %128 = arith.addf %127, %12 : vector<16x16xf32>
    %cst_32 = arith.constant dense<0xFF800000> : vector<16xf32>
    %129 = vector.multi_reduction <maximumf>, %128, %cst_32 [1] : vector<16x16xf32> to vector<16xf32>
    %130 = vector.shape_cast %129 : vector<16xf32> to vector<16x1xf32>
    %131 = vector.broadcast %130 : vector<16x1xf32> to vector<16x16xf32>
    %132 = arith.subf %128, %131 : vector<16x16xf32>
    %133 = math.exp %132 : vector<16x16xf32>
    %cst_33 = arith.constant dense<0.000000e+00> : vector<16xf32>
    %134 = vector.multi_reduction <add>, %133, %cst_33 [1] : vector<16x16xf32> to vector<16xf32>
    %135 = vector.shape_cast %134 : vector<16xf32> to vector<16x1xf32>
    %136 = tpu.reciprocal %135 {approx = true} : vector<16x1xf32> -> vector<16x1xf32>
    %137 = vector.broadcast %136 : vector<16x1xf32> to vector<16x16xf32>
    %138 = arith.mulf %133, %137 : vector<16x16xf32>
    %139 = vector.extract_strided_slice %11 {offsets = [0, 36], sizes = [16, 4], strides = [1, 1]} : vector<16x480xf32> to vector<16x4xf32>
    %140 = vector.extract_strided_slice %11 {offsets = [0, 76], sizes = [16, 4], strides = [1, 1]} : vector<16x480xf32> to vector<16x4xf32>
    %cst_34 = arith.constant dense<0.000000e+00> : vector<16x16xf32>
    %141 = tpu.matmul %139, %140, %cst_34 {dimension_numbers = #tpu.dot_dimension_numbers<[1], [1], [0], [0], [0, 0, 1, 0], [], []>} : vector<16x4xf32>, vector<16x4xf32>, vector<16x16xf32> -> vector<16x16xf32>
    %142 = arith.addf %141, %12 : vector<16x16xf32>
    %cst_35 = arith.constant dense<0xFF800000> : vector<16xf32>
    %143 = vector.multi_reduction <maximumf>, %142, %cst_35 [1] : vector<16x16xf32> to vector<16xf32>
    %144 = vector.shape_cast %143 : vector<16xf32> to vector<16x1xf32>
    %145 = vector.broadcast %144 : vector<16x1xf32> to vector<16x16xf32>
    %146 = arith.subf %142, %145 : vector<16x16xf32>
    %147 = math.exp %146 : vector<16x16xf32>
    %cst_36 = arith.constant dense<0.000000e+00> : vector<16xf32>
    %148 = vector.multi_reduction <add>, %147, %cst_36 [1] : vector<16x16xf32> to vector<16xf32>
    %149 = vector.shape_cast %148 : vector<16xf32> to vector<16x1xf32>
    %150 = tpu.reciprocal %149 {approx = true} : vector<16x1xf32> -> vector<16x1xf32>
    %151 = vector.broadcast %150 : vector<16x1xf32> to vector<16x16xf32>
    %152 = arith.mulf %147, %151 : vector<16x16xf32>
    %153 = tpu.concatenate %26, %40, %54, %68, %82, %96, %110, %124, %138, %152 in 1 : vector<16x16xf32>, vector<16x16xf32>, vector<16x16xf32>, vector<16x16xf32>, vector<16x16xf32>, vector<16x16xf32>, vector<16x16xf32>, vector<16x16xf32>, vector<16x16xf32>, vector<16x16xf32> -> vector<16x160xf32>
    %154 = vector.extract_strided_slice %11 {offsets = [0, 80], sizes = [16, 40], strides = [1, 1]} : vector<16x480xf32> to vector<16x40xf32>
    %155 = vector.extract_strided_slice %11 {offsets = [0, 120], sizes = [16, 40], strides = [1, 1]} : vector<16x480xf32> to vector<16x40xf32>
    %156 = vector.extract_strided_slice %11 {offsets = [0, 160], sizes = [16, 40], strides = [1, 1]} : vector<16x480xf32> to vector<16x40xf32>
    %157 = vector.extract_strided_slice %11 {offsets = [0, 200], sizes = [16, 40], strides = [1, 1]} : vector<16x480xf32> to vector<16x40xf32>
    %158 = vector.extract_strided_slice %11 {offsets = [0, 240], sizes = [16, 40], strides = [1, 1]} : vector<16x480xf32> to vector<16x40xf32>
    %159 = vector.extract_strided_slice %11 {offsets = [0, 280], sizes = [16, 40], strides = [1, 1]} : vector<16x480xf32> to vector<16x40xf32>
    %160 = vector.extract_strided_slice %11 {offsets = [0, 320], sizes = [16, 40], strides = [1, 1]} : vector<16x480xf32> to vector<16x40xf32>
    %161 = vector.extract_strided_slice %11 {offsets = [0, 360], sizes = [16, 40], strides = [1, 1]} : vector<16x480xf32> to vector<16x40xf32>
    %162 = vector.extract_strided_slice %11 {offsets = [0, 400], sizes = [16, 40], strides = [1, 1]} : vector<16x480xf32> to vector<16x40xf32>
    %163 = vector.extract_strided_slice %11 {offsets = [0, 440], sizes = [16, 40], strides = [1, 1]} : vector<16x480xf32> to vector<16x40xf32>
    %164 = tpu.concatenate %154, %155, %156, %157, %158, %159, %160, %161, %162, %163 in 0 : vector<16x40xf32>, vector<16x40xf32>, vector<16x40xf32>, vector<16x40xf32>, vector<16x40xf32>, vector<16x40xf32>, vector<16x40xf32>, vector<16x40xf32>, vector<16x40xf32>, vector<16x40xf32> -> vector<160x40xf32>
    %cst_37 = arith.constant dense<0.000000e+00> : vector<16x40xf32>
    %165 = tpu.matmul %153, %164, %cst_37 {dimension_numbers = #tpu.dot_dimension_numbers<[1], [0], [0], [1], [0, 0, 1, 1], [], []>} : vector<16x160xf32>, vector<160x40xf32>, vector<16x40xf32> -> vector<16x40xf32>
    %c37 = arith.constant 37 : index
    %c0_38 = arith.constant 0 : index
    %166 = vector.load %arg1[%c37, %c0_38] : memref<104x128xf32, #tpu.memory_space<vmem>>, vector<1x40xf32>
    %167 = vector.broadcast %166 : vector<1x40xf32> to vector<16x40xf32>
    %168 = arith.addf %165, %167 : vector<16x40xf32>
    %169 = arith.addf %6, %168 : vector<16x40xf32>
    %c32 = arith.constant 32 : index
    %c0_39 = arith.constant 0 : index
    %170 = vector.load %arg1[%c32, %c0_39] : memref<104x128xf32, #tpu.memory_space<vmem>>, vector<1x40xf32>
    %c33 = arith.constant 33 : index
    %c0_40 = arith.constant 0 : index
    %171 = vector.load %arg1[%c33, %c0_40] : memref<104x128xf32, #tpu.memory_space<vmem>>, vector<1x40xf32>
    %cst_41 = arith.constant dense<0.000000e+00> : vector<16xf32>
    %172 = vector.multi_reduction <add>, %169, %cst_41 [1] : vector<16x40xf32> to vector<16xf32>
    %173 = vector.shape_cast %172 : vector<16xf32> to vector<16x1xf32>
    %cst_42 = arith.constant 4.000000e+01 : f32
    %174 = vector.broadcast %cst_42 : f32 to vector<16x1xf32>
    %175 = arith.divf %173, %174 : vector<16x1xf32>
    %176 = vector.broadcast %175 : vector<16x1xf32> to vector<16x40xf32>
    %177 = arith.subf %169, %176 : vector<16x40xf32>
    %178 = arith.mulf %177, %177 : vector<16x40xf32>
    %cst_43 = arith.constant dense<0.000000e+00> : vector<16xf32>
    %179 = vector.multi_reduction <add>, %178, %cst_43 [1] : vector<16x40xf32> to vector<16xf32>
    %180 = vector.shape_cast %179 : vector<16xf32> to vector<16x1xf32>
    %cst_44 = arith.constant 4.000000e+01 : f32
    %181 = vector.broadcast %cst_44 : f32 to vector<16x1xf32>
    %182 = arith.divf %180, %181 : vector<16x1xf32>
    %cst_45 = arith.constant 9.99999974E-6 : f32
    %183 = vector.broadcast %cst_45 : f32 to vector<16x1xf32>
    %184 = arith.addf %182, %183 : vector<16x1xf32>
    %185 = math.rsqrt %184 : vector<16x1xf32>
    %186 = vector.broadcast %185 : vector<16x1xf32> to vector<16x40xf32>
    %187 = arith.mulf %177, %186 : vector<16x40xf32>
    %188 = vector.broadcast %170 : vector<1x40xf32> to vector<16x40xf32>
    %189 = arith.mulf %187, %188 : vector<16x40xf32>
    %190 = vector.broadcast %171 : vector<1x40xf32> to vector<16x40xf32>
    %191 = arith.addf %189, %190 : vector<16x40xf32>
    %c0_i32_46 = arith.constant 0 : i32
    %192 = tpu.memref_slice %arg9[%c0_i32_46] : memref<2x!tpu.dma_semaphore, #tpu.memory_space<semaphore_mem>> -> memref<1x!tpu.dma_semaphore, #tpu.memory_space<semaphore_mem>>
    %193 = tpu.memref_squeeze %192 : memref<1x!tpu.dma_semaphore, #tpu.memory_space<semaphore_mem>> -> memref<!tpu.dma_semaphore, #tpu.memory_space<semaphore_mem>>
    tpu.wait_dma2 semaphore(%193 : memref<!tpu.dma_semaphore, #tpu.memory_space<semaphore_mem>>) src(%arg3 : memref<40x2048xbf16, #tpu.memory_space<any>>) dst(%arg7 : memref<40x2048xbf16, #tpu.memory_space<vmem>>)
    %194 = arith.truncf %191 : vector<16x40xf32> to vector<16x40xbf16>
    %c0_47 = arith.constant 0 : index
    %c0_48 = arith.constant 0 : index
    %195 = vector.load %arg7[%c0_47, %c0_48] : memref<40x2048xbf16, #tpu.memory_space<vmem>>, vector<40x2048xbf16>
    %cst_49 = arith.constant dense<0.000000e+00> : vector<16x2048xf32>
    %196 = tpu.matmul %194, %195, %cst_49 {dimension_numbers = #tpu.dot_dimension_numbers<[1], [0], [0], [1], [0, 0, 1, 1], [], []>} : vector<16x40xbf16>, vector<40x2048xbf16>, vector<16x2048xf32> -> vector<16x2048xf32>
    %c0_50 = arith.constant 0 : index
    %c0_51 = arith.constant 0 : index
    %197 = vector.load %arg5[%c0_50, %c0_51] : memref<1x2048xf32, #tpu.memory_space<vmem>>, vector<1x2048xf32>
    %198 = vector.broadcast %197 : vector<1x2048xf32> to vector<16x2048xf32>
    %199 = arith.addf %196, %198 : vector<16x2048xf32>
    %cst_52 = arith.constant 0.000000e+00 : f32
    %200 = vector.broadcast %cst_52 : f32 to vector<16x2048xf32>
    %201 = arith.maximumf %199, %200 : vector<16x2048xf32>
    %c1_i32_53 = arith.constant 1 : i32
    %202 = tpu.memref_slice %arg9[%c1_i32_53] : memref<2x!tpu.dma_semaphore, #tpu.memory_space<semaphore_mem>> -> memref<1x!tpu.dma_semaphore, #tpu.memory_space<semaphore_mem>>
    %203 = tpu.memref_squeeze %202 : memref<1x!tpu.dma_semaphore, #tpu.memory_space<semaphore_mem>> -> memref<!tpu.dma_semaphore, #tpu.memory_space<semaphore_mem>>
    tpu.wait_dma2 semaphore(%203 : memref<!tpu.dma_semaphore, #tpu.memory_space<semaphore_mem>>) src(%arg4 : memref<40x2048xbf16, #tpu.memory_space<any>>) dst(%arg8 : memref<40x2048xbf16, #tpu.memory_space<vmem>>)
    %204 = arith.truncf %201 : vector<16x2048xf32> to vector<16x2048xbf16>
    %c0_54 = arith.constant 0 : index
    %c0_55 = arith.constant 0 : index
    %205 = vector.load %arg8[%c0_54, %c0_55] : memref<40x2048xbf16, #tpu.memory_space<vmem>>, vector<40x2048xbf16>
    %cst_56 = arith.constant dense<0.000000e+00> : vector<16x40xf32>
    %206 = tpu.matmul %204, %205, %cst_56 {dimension_numbers = #tpu.dot_dimension_numbers<[1], [1], [0], [0], [0, 0, 1, 0], [], []>} : vector<16x2048xbf16>, vector<40x2048xbf16>, vector<16x40xf32> -> vector<16x40xf32>
    %c36 = arith.constant 36 : index
    %c0_57 = arith.constant 0 : index
    %207 = vector.load %arg1[%c36, %c0_57] : memref<104x128xf32, #tpu.memory_space<vmem>>, vector<1x40xf32>
    %208 = vector.broadcast %207 : vector<1x40xf32> to vector<16x40xf32>
    %209 = arith.addf %206, %208 : vector<16x40xf32>
    %210 = arith.addf %191, %209 : vector<16x40xf32>
    %c34 = arith.constant 34 : index
    %c0_58 = arith.constant 0 : index
    %211 = vector.load %arg1[%c34, %c0_58] : memref<104x128xf32, #tpu.memory_space<vmem>>, vector<1x40xf32>
    %c35 = arith.constant 35 : index
    %c0_59 = arith.constant 0 : index
    %212 = vector.load %arg1[%c35, %c0_59] : memref<104x128xf32, #tpu.memory_space<vmem>>, vector<1x40xf32>
    %cst_60 = arith.constant dense<0.000000e+00> : vector<16xf32>
    %213 = vector.multi_reduction <add>, %210, %cst_60 [1] : vector<16x40xf32> to vector<16xf32>
    %214 = vector.shape_cast %213 : vector<16xf32> to vector<16x1xf32>
    %cst_61 = arith.constant 4.000000e+01 : f32
    %215 = vector.broadcast %cst_61 : f32 to vector<16x1xf32>
    %216 = arith.divf %214, %215 : vector<16x1xf32>
    %217 = vector.broadcast %216 : vector<16x1xf32> to vector<16x40xf32>
    %218 = arith.subf %210, %217 : vector<16x40xf32>
    %219 = arith.mulf %218, %218 : vector<16x40xf32>
    %cst_62 = arith.constant dense<0.000000e+00> : vector<16xf32>
    %220 = vector.multi_reduction <add>, %219, %cst_62 [1] : vector<16x40xf32> to vector<16xf32>
    %221 = vector.shape_cast %220 : vector<16xf32> to vector<16x1xf32>
    %cst_63 = arith.constant 4.000000e+01 : f32
    %222 = vector.broadcast %cst_63 : f32 to vector<16x1xf32>
    %223 = arith.divf %221, %222 : vector<16x1xf32>
    %cst_64 = arith.constant 9.99999974E-6 : f32
    %224 = vector.broadcast %cst_64 : f32 to vector<16x1xf32>
    %225 = arith.addf %223, %224 : vector<16x1xf32>
    %226 = math.rsqrt %225 : vector<16x1xf32>
    %227 = vector.broadcast %226 : vector<16x1xf32> to vector<16x40xf32>
    %228 = arith.mulf %218, %227 : vector<16x40xf32>
    %229 = vector.broadcast %211 : vector<1x40xf32> to vector<16x40xf32>
    %230 = arith.mulf %228, %229 : vector<16x40xf32>
    %231 = vector.broadcast %212 : vector<1x40xf32> to vector<16x40xf32>
    %232 = arith.addf %230, %231 : vector<16x40xf32>
    %c40_65 = arith.constant 40 : index
    %c0_66 = arith.constant 0 : index
    %233 = vector.load %arg1[%c40_65, %c0_66] : memref<104x128xf32, #tpu.memory_space<vmem>>, vector<40x20xf32>
    %cst_67 = arith.constant dense<0.000000e+00> : vector<16x20xf32>
    %234 = tpu.matmul %232, %233, %cst_67 {dimension_numbers = #tpu.dot_dimension_numbers<[1], [0], [0], [1], [0, 0, 1, 1], [], []>} : vector<16x40xf32>, vector<40x20xf32>, vector<16x20xf32> -> vector<16x20xf32>
    %c100 = arith.constant 100 : index
    %c0_68 = arith.constant 0 : index
    %235 = vector.load %arg1[%c100, %c0_68] : memref<104x128xf32, #tpu.memory_space<vmem>>, vector<1x20xf32>
    %236 = vector.broadcast %235 : vector<1x20xf32> to vector<16x20xf32>
    %237 = arith.addf %234, %236 : vector<16x20xf32>
    %cst_69 = arith.constant 0.000000e+00 : f32
    %238 = vector.broadcast %cst_69 : f32 to vector<16x20xf32>
    %239 = arith.maximumf %237, %238 : vector<16x20xf32>
    %c80 = arith.constant 80 : index
    %c0_70 = arith.constant 0 : index
    %240 = vector.load %arg1[%c80, %c0_70] : memref<104x128xf32, #tpu.memory_space<vmem>>, vector<20x10xf32>
    %cst_71 = arith.constant dense<0.000000e+00> : vector<16x10xf32>
    %241 = tpu.matmul %239, %240, %cst_71 {dimension_numbers = #tpu.dot_dimension_numbers<[1], [0], [0], [1], [0, 0, 1, 1], [], []>} : vector<16x20xf32>, vector<20x10xf32>, vector<16x10xf32> -> vector<16x10xf32>
    %c101 = arith.constant 101 : index
    %c0_72 = arith.constant 0 : index
    %242 = vector.load %arg1[%c101, %c0_72] : memref<104x128xf32, #tpu.memory_space<vmem>>, vector<1x10xf32>
    %243 = vector.broadcast %242 : vector<1x10xf32> to vector<16x10xf32>
    %244 = arith.addf %241, %243 : vector<16x10xf32>
    %cst_73 = arith.constant 0.000000e+00 : f32
    %245 = vector.broadcast %cst_73 : f32 to vector<16x10xf32>
    %246 = arith.maximumf %244, %245 : vector<16x10xf32>
    %c102 = arith.constant 102 : index
    %c0_74 = arith.constant 0 : index
    %247 = vector.load %arg1[%c102, %c0_74] : memref<104x128xf32, #tpu.memory_space<vmem>>, vector<1x10xf32>
    %248 = vector.broadcast %247 : vector<1x10xf32> to vector<16x10xf32>
    %249 = arith.mulf %246, %248 : vector<16x10xf32>
    %cst_75 = arith.constant dense<0.000000e+00> : vector<16xf32>
    %250 = vector.multi_reduction <add>, %249, %cst_75 [1] : vector<16x10xf32> to vector<16xf32>
    %251 = vector.shape_cast %250 : vector<16xf32> to vector<16x1xf32>
    %c103 = arith.constant 103 : index
    %c0_76 = arith.constant 0 : index
    %252 = vector.load %arg1[%c103, %c0_76] : memref<104x128xf32, #tpu.memory_space<vmem>>, vector<1x1xf32>
    %253 = vector.broadcast %252 : vector<1x1xf32> to vector<16x1xf32>
    %254 = arith.addf %251, %253 : vector<16x1xf32>
    %c0_77 = arith.constant 0 : index
    %c0_78 = arith.constant 0 : index
    %255 = vector.load %arg6[%c0_77, %c0_78] : memref<16x1xf32, #tpu.memory_space<vmem>>, vector<16x1xf32>
    tpu.vector_store %arg6[%c0_77, %c0_78], %254 {strides = array<i32>} : memref<16x1xf32, #tpu.memory_space<vmem>>, vector<16x1xf32>,
    return
  }
}

</mosaic_0001>

<llo_original>
// kernel: tpu_custom_call.1
$region0: #{tpu_custom_call.1}
  #allocation0 [shape = 'u32[]', space=smem, size = 0x4, offset = 0x4, fixed_abs, tag = 'smem constant byte address 0x4 - core index']
  #allocation1 [shape = 'u32[72,128]{1,0:T(1,128)}', space=vmem, size = 0x9000, scoped, tag = 'internal scratch']
  #allocation2 [shape = 'bf16[40,2048]{1,0:T(8,128)(2,1)}', space=vmem, size = 0x28000, scoped, tag = 'scratch operand']
  #allocation3 [shape = 'bf16[40,2048]{1,0:T(8,128)(2,1)}', space=vmem, size = 0x28000, scoped, tag = 'scratch operand']
  #allocation4 [shape = 's32[2]{0}', space=sflag, size = 0x8, scoped, tag = 'scratch operand']
  #allocation12 [shape = 's32[]', space=sflag, size = 0x4, offset = 0, fixed_abs, tag = 'sflag constant byte address 0x0 - dummy sync flag']
  #allocation13 [shape = 's32[]', space=sflag, size = 0x4, offset = 0, fixed_abs, tag = 'sflag constant byte address 0x0 - dummy sync flag']
  #allocation14 [shape = 'u32[]', space=smem, size = 0x4, offset = 0x44, fixed_abs, tag = 'smem constant byte address 0x44 - assertion arg 0']
  #allocation15 [shape = 'u32[]', space=smem, size = 0x4, offset = 0x48, fixed_abs, tag = 'smem constant byte address 0x48 - assertion arg 1']
  #allocation16 [shape = 's32[]', space=sflag, size = 0x4, offset = 0, fixed_abs, tag = 'sflag constant byte address 0x0 - dummy sync flag']
  #allocation17 [shape = 's32[]', space=sflag, size = 0x4, offset = 0, fixed_abs, tag = 'sflag constant byte address 0x0 - dummy sync flag']
  %s0 = inlined_call_operand.hbm [shape: f32[16,40], index: 0, kind: input, shape index: {}]
  %s1 = inlined_call_operand.hbm [shape: f32[104,128], index: 1, kind: input, shape index: {}]
  %s2 = inlined_call_operand.hbm [shape: f32[41,480], index: 2, kind: input, shape index: {}]
  %s3 = inlined_call_operand.hbm [shape: bf16[40,2048], index: 3, kind: input, shape index: {}]
  %s4 = inlined_call_operand.hbm [shape: bf16[40,2048], index: 4, kind: input, shape index: {}]
  %s5 = inlined_call_operand.hbm [shape: f32[1,2048], index: 5, kind: input, shape index: {}]
  %s6 = inlined_call_operand.vmem [shape: f32[16,1], index: 6, kind: output, shape index: {}]
  %s7 = sld [smem:[#allocation0]]
  $region50: #{tpu_custom_call.1} parent=0
    _
  %s9 = ssub.s32 1, %s7
  %s10 = scalar_select 0, %s9, %s7
  $region1: #{tpu_custom_call.1} parent=0
    #allocation5 [shape = 'u8[8192]{0}', space=vmem, size = 0x2000, scoped, tag = 'input window, operand 0, single buffered']
    #allocation6 [shape = 's32[1]{0}', space=sflag, size = 0x4, scoped, tag = 'scoped memory for tpu_custom_call.1']
    #allocation7 [shape = 'u8[53248]{0}', space=vmem, size = 0xd000, scoped, tag = 'input window, operand 1, single buffered']
    #allocation8 [shape = 's32[1]{0}', space=sflag, size = 0x4, scoped, tag = 'scoped memory for tpu_custom_call.1']
    #allocation9 [shape = 'u8[98304]{0}', space=vmem, size = 0x18000, scoped, tag = 'input window, operand 2, single buffered']
    #allocation10 [shape = 'u8[8192]{0}', space=vmem, size = 0x2000, scoped, tag = 'input window, operand 5, single buffered']
    #allocation11 [shape = 's32[1]{0}', space=sflag, size = 0x4, scoped, tag = 'scoped memory for tpu_custom_call.1']
    %11 = vsyncpa [#allocation6], 0
    %12 = vsyncpa [#allocation8], 0
    %13 = vsyncpa [#allocation11], 0
    // Predicated region
    $region2: #{tpu_custom_call.1} parent=1 // pred_check
      _
    $region3: #{tpu_custom_call.1} parent=1 // pred_check_branch
      %15 = sbr.rel (0) target = $region5
    $region4: #{tpu_custom_call.1} parent=1 // pred_region
      %17 = vsyncadd [#allocation6], 0
      %s18 = sshll.u32 %s0, 4
      %s19 = int_to_ptr.hbm [resolvable:$true] %s18
      %s20 = sshll.u32 [#allocation5], 4
      %s21 = int_to_ptr.vmem [resolvable:$true] %s20
      %26 = dma.hbm_to_vmem [thread:$0]  %s19, 256, %s21, [#allocation6], 128, 128, 8
    $region5: #{tpu_custom_call.1} parent=1 // pred_fallthru
      _
    // Predicated region
    $region6: #{tpu_custom_call.1} parent=1 // pred_check
      _
    $region7: #{tpu_custom_call.1} parent=1 // pred_check_branch
      %28 = sbr.rel (0) target = $region9
    $region8: #{tpu_custom_call.1} parent=1 // pred_region
      %30 = vsyncadd [#allocation8], 0
      %s31 = sshll.u32 %s1, 4
      %s32 = int_to_ptr.hbm [resolvable:$true] %s31
      %s33 = sshll.u32 [#allocation7], 4
      %s34 = int_to_ptr.vmem [resolvable:$true] %s33
      %39 = dma.hbm_to_vmem [thread:$0]  %s32, 1664, %s34, [#allocation8], 128, 128, 8
    $region9: #{tpu_custom_call.1} parent=1 // pred_fallthru
      _
    // Predicated region
    $region10: #{tpu_custom_call.1} parent=1 // pred_check
      _
    $region11: #{tpu_custom_call.1} parent=1 // pred_check_branch
      %41 = sbr.rel (0) target = $region13
    $region12: #{tpu_custom_call.1} parent=1 // pred_region
      %43 = vsyncadd [#allocation8], 0
      %s44 = sshll.u32 %s2, 4
      %s45 = int_to_ptr.hbm [resolvable:$true] %s44
      %s46 = sshll.u32 [#allocation9], 4
      %s47 = int_to_ptr.vmem [resolvable:$true] %s46
      %52 = dma.hbm_to_vmem [thread:$0]  %s45, 3072, %s47, [#allocation8], 512, 512, 32
    $region13: #{tpu_custom_call.1} parent=1 // pred_fallthru
      _
    // Predicated region
    $region14: #{tpu_custom_call.1} parent=1 // pred_check
      _
    $region15: #{tpu_custom_call.1} parent=1 // pred_check_branch
      %54 = sbr.rel (0) target = $region17
    $region16: #{tpu_custom_call.1} parent=1 // pred_region
      %56 = vsyncadd [#allocation11], 0
      %s58 = sshll.u32 %s5, 4
      %s59 = int_to_ptr.hbm [resolvable:$true] %s58
      %s60 = sshll.u32 [#allocation10], 4
      %s61 = int_to_ptr.vmem [resolvable:$true] %s60
      %63 = dma.hbm_to_vmem [thread:$0]  %s59, 256, %s61, [#allocation11]
    $region17: #{tpu_custom_call.1} parent=1 // pred_fallthru
      _
    // Predicated region
    $region18: #{tpu_custom_call.1} parent=1 // pred_check
      _
    $region19: #{tpu_custom_call.1} parent=1 // pred_check_branch
      %65 = sbr.rel (0) target = $region21
    $region20: #{tpu_custom_call.1} parent=1 // pred_region
      %67 = dma.done [#allocation6], 256
    $region21: #{tpu_custom_call.1} parent=1 // pred_fallthru
      _
    // Predicated region
    $region22: #{tpu_custom_call.1} parent=1 // pred_check
      _
    $region23: #{tpu_custom_call.1} parent=1 // pred_check_branch
      %69 = sbr.rel (0) target = $region25
    $region24: #{tpu_custom_call.1} parent=1 // pred_region
      %71 = dma.done [#allocation8], 1664
    $region25: #{tpu_custom_call.1} parent=1 // pred_fallthru
      _
    // Predicated region
    $region26: #{tpu_custom_call.1} parent=1 // pred_check
      _
    $region27: #{tpu_custom_call.1} parent=1 // pred_check_branch
      %73 = sbr.rel (0) target = $region29
    $region28: #{tpu_custom_call.1} parent=1 // pred_region
      %75 = dma.done [#allocation8], 3072
    $region29: #{tpu_custom_call.1} parent=1 // pred_fallthru
      _
    // Predicated region
    $region30: #{tpu_custom_call.1} parent=1 // pred_check
      _
    $region31: #{tpu_custom_call.1} parent=1 // pred_check_branch
      %77 = sbr.rel (0) target = $region33
    $region32: #{tpu_custom_call.1} parent=1 // pred_region
      %79 = dma.done [#allocation11], 256
    $region33: #{tpu_custom_call.1} parent=1 // pred_fallthru
      _
    // Predicated region
    $region34: #{tpu_custom_call.1} parent=1 // pred_check
      _
    $region35: #{tpu_custom_call.1} parent=1 // pred_check_branch
      %82 = sbr.rel target = $region37
    $region36: #{tpu_custom_call.1} parent=1 // pred_region
      %83 = sst [smem:[#allocation14]] [#allocation13]
      %84 = sst [smem:[#allocation15]] [#allocation12]
    $region37: #{tpu_custom_call.1} parent=1 // pred_fallthru
      _
    %86 = shalt.err (0)
    %s88 = sshll.u32 %s3, 4
    %s89 = int_to_ptr.hbm [resolvable:$true] %s88
    %s90 = sshll.u32 [#allocation2], 4
    %s91 = int_to_ptr.vmem [resolvable:$true] %s90
    %93 = dma.hbm_to_vmem [thread:$0]  %s89, 5120, %s91, [#allocation4]
    %s94 = scalar_lea.sflag [#allocation4], 1
    // Predicated region
    $region38: #{tpu_custom_call.1} parent=1 // pred_check
      _
    $region39: #{tpu_custom_call.1} parent=1 // pred_check_branch
      %96 = sbr.rel target = $region41
    $region40: #{tpu_custom_call.1} parent=1 // pred_region
      %97 = sst [smem:[#allocation14]] [#allocation17]
      %98 = sst [smem:[#allocation15]] [#allocation16]
    $region41: #{tpu_custom_call.1} parent=1 // pred_fallthru
      _
    %100 = shalt.err (0)
    %s102 = sshll.u32 %s4, 4
    %s103 = int_to_ptr.hbm [resolvable:$true] %s102
    %s104 = sshll.u32 [#allocation3], 4
    %s105 = int_to_ptr.vmem [resolvable:$true] %s104
    %107 = dma.hbm_to_vmem [thread:$0]  %s103, 5120, %s105, %s94
    %v108 = vld [vmem:[#allocation5] sm:$0xff]
    %v109 = vld [vmem:[#allocation5 + $0x8] sm:$0xff]
    %v110 = vld [vmem:[#allocation7] sm:$0xff]
    %v111 = vld [vmem:[#allocation7 + $0x8] sm:$0xff]
    %v112 = vadd.f32 %v108, %v110
    %v113 = vadd.f32 %v109, %v111
    %v114 = vld [vmem:[#allocation9] sm:$0xff]
    %v115 = vld [vmem:[#allocation9 + $0x8] sm:$0xff]
    %v116 = vld [vmem:[#allocation9 + $0x10] sm:$0xff]
    %v117 = vld [vmem:[#allocation9 + $0x18] sm:$0xff]
    %v118 = vld [vmem:[#allocation9 + $0x20] sm:$0xff]
    %v119 = vld [vmem:[#allocation9 + $0x28] sm:$0xff]
    %v120 = vld [vmem:[#allocation9 + $0x30] sm:$0xff]
    %v121 = vld [vmem:[#allocation9 + $0x38] sm:$0xff]
    %v122 = vld [vmem:[#allocation9 + $0x40] sm:$0xff]
    %v123 = vld [vmem:[#allocation9 + $0x48] sm:$0xff]
    %v124 = vld [vmem:[#allocation9 + $0x50] sm:$0xff]
    %v125 = vld [vmem:[#allocation9 + $0x58] sm:$0xff]
    %v126 = vld [vmem:[#allocation9 + $0x60] sm:$0xff]
    %v127 = vld [vmem:[#allocation9 + $0x68] sm:$0xff]
    %v128 = vld [vmem:[#allocation9 + $0x70] sm:$0xff]
    %v129 = vld [vmem:[#allocation9 + $0x78] sm:$0xff]
    %v130 = vld [vmem:[#allocation9 + $0x80] sm:$0xff]
    %v131 = vld [vmem:[#allocation9 + $0x88] sm:$0xff]
    %v132 = vld [vmem:[#allocation9 + $0x90] sm:$0xff]
    %v133 = vld [vmem:[#allocation9 + $0x98] sm:$0xff]
    %s134 = scalar_lea.vmem [#allocation9], 160
    %v135 = vld [vmem:[%s134] ss:$8 sm:$0xf]
    %v137 = vperm.slane %v135, 0
    %v138 = vperm.slane %v135, 1
    %v139 = vperm.slane %v135, 2
    %v140 = vperm.slane %v135, 3
    %vm145 = vcmask 326656
    %v147 = vsel %vm145, %v112, 0
    %v150 = vsel %vm145, %v113, 0
    %152 = vmatpush.msra.mxu0 0.0
    %153 = vmatpush.msra.mxu0 0.0
    %154 = vmatpush.msra.mxu0 0.0
    %155 = vmatpush.msra.mxu0 0.0
    %156 = vmatpush.msra.mxu0 0.0
    %157 = vmatpush.msra.mxu0 0.0
    %158 = vmatpush.msra.mxu0 0.0
    %159 = vmatpush.msra.mxu0 0.0
    %160 = vmatpush.msra.mxu0 0.0
    %161 = vmatpush.msra.mxu0 0.0
    %162 = vmatpush.msra.mxu0 0.0
    %163 = vmatpush.msra.mxu0 %v130
    %164 = vmatpush.msra.mxu0 %v126
    %165 = vmatpush.msra.mxu0 %v122
    %166 = vmatpush.msra.mxu0 %v118
    %167 = vmatpush.msra.mxu0 %v114
    %168 = vmatmul.f32.gmra.mxu0 %v147
    %v169 = vpop.f32.mrf.mxu0
    %v170 = vadd.f32 %v137, %v169
    %171 = vmatmul.f32.gmra.mxu0 %v150
    %v172 = vpop.f32.mrf.mxu0
    %v173 = vadd.f32 %v137, %v172
    %174 = vdwg.mxu0
    %175 = vmatpush.msra.mxu0 0.0
    %176 = vmatpush.msra.mxu0 0.0
    %177 = vmatpush.msra.mxu0 0.0
    %178 = vmatpush.msra.mxu0 0.0
    %179 = vmatpush.msra.mxu0 0.0
    %180 = vmatpush.msra.mxu0 0.0
    %181 = vmatpush.msra.mxu0 0.0
    %182 = vmatpush.msra.mxu0 0.0
    %183 = vmatpush.msra.mxu0 0.0
    %184 = vmatpush.msra.mxu0 0.0
    %185 = vmatpush.msra.mxu0 0.0
    %186 = vmatpush.msra.mxu0 %v131
    %187 = vmatpush.msra.mxu0 %v127
    %188 = vmatpush.msra.mxu0 %v123
    %189 = vmatpush.msra.mxu0 %v119
    %190 = vmatpush.msra.mxu0 %v115
    %191 = vmatmul.f32.gmra.mxu0 %v147
    %v192 = vpop.f32.mrf.mxu0
    %v193 = vadd.f32 %v138, %v192
    %194 = vmatmul.f32.gmra.mxu0 %v150
    %v195 = vpop.f32.mrf.mxu0
    %v196 = vadd.f32 %v138, %v195
    %197 = vdwg.mxu0
    %198 = vmatpush.msra.mxu0 0.0
    %199 = vmatpush.msra.mxu0 0.0
    %200 = vmatpush.msra.mxu0 0.0
    %201 = vmatpush.msra.mxu0 0.0
    %202 = vmatpush.msra.mxu0 0.0
    %203 = vmatpush.msra.mxu0 0.0
    %204 = vmatpush.msra.mxu0 0.0
    %205 = vmatpush.msra.mxu0 0.0
    %206 = vmatpush.msra.mxu0 0.0
    %207 = vmatpush.msra.mxu0 0.0
    %208 = vmatpush.msra.mxu0 0.0
    %209 = vmatpush.msra.mxu0 %v132
    %210 = vmatpush.msra.mxu0 %v128
    %211 = vmatpush.msra.mxu0 %v124
    %212 = vmatpush.msra.mxu0 %v120
    %213 = vmatpush.msra.mxu0 %v116
    %214 = vmatmul.f32.gmra.mxu0 %v147
    %v215 = vpop.f32.mrf.mxu0
    %v216 = vadd.f32 %v139, %v215
    %217 = vmatmul.f32.gmra.mxu0 %v150
    %v218 = vpop.f32.mrf.mxu0
    %v219 = vadd.f32 %v139, %v218
    %220 = vdwg.mxu0
    %221 = vmatpush.msra.mxu0 0.0
    %222 = vmatpush.msra.mxu0 0.0
    %223 = vmatpush.msra.mxu0 0.0
    %224 = vmatpush.msra.mxu0 0.0
    %225 = vmatpush.msra.mxu0 0.0
    %226 = vmatpush.msra.mxu0 0.0
    %227 = vmatpush.msra.mxu0 0.0
    %228 = vmatpush.msra.mxu0 0.0
    %229 = vmatpush.msra.mxu0 0.0
    %230 = vmatpush.msra.mxu0 0.0
    %231 = vmatpush.msra.mxu0 0.0
    %232 = vmatpush.msra.mxu0 %v133
    %233 = vmatpush.msra.mxu0 %v129
    %234 = vmatpush.msra.mxu0 %v125
    %235 = vmatpush.msra.mxu0 %v121
    %236 = vmatpush.msra.mxu0 %v117
    %237 = vmatmul.f32.gmra.mxu0 %v147
    %v238 = vpop.f32.mrf.mxu0
    %v239 = vadd.f32 %v140, %v238
    %240 = vmatmul.f32.gmra.mxu0 %v150
    %v241 = vpop.f32.mrf.mxu0
    %v242 = vadd.f32 %v140, %v241
    %243 = vdwg.mxu0
    %v244 = vld [vmem:[#allocation7 + $0x10] sm:$0xff]
    %v245 = vld [vmem:[#allocation7 + $0x18] sm:$0xff]
    %248 = vrot.lane.b32.xlu0 %v170, 88
    %v249 = vpop.permute.xlu0 %248
    %250 = vrot.lane.b32.xlu0 %v173, 88
    %v251 = vpop.permute.xlu0 %250
    %vm252 = vcmask 31744
    %v253 = vsel %vm252, %v170, 0
    %v255 = vsel %vm252, %v173, 0
    %v257 = vsel %vm252, %v249, 0
    %v259 = vsel %vm252, %v251, 0
    %261 = vmatpush.xpose.msra.mxu0 0.0
    %262 = vmatpush.xpose.msra.mxu0 0.0
    %263 = vmatpush.xpose.msra.mxu0 0.0
    %264 = vmatpush.xpose.msra.mxu0 0.0
    %265 = vmatpush.xpose.msra.mxu0 0.0
    %266 = vmatpush.xpose.msra.mxu0 0.0
    %267 = vmatpush.xpose.msra.mxu0 0.0
    %268 = vmatpush.xpose.msra.mxu0 0.0
    %269 = vmatpush.xpose.msra.mxu0 0.0
    %270 = vmatpush.xpose.msra.mxu0 0.0
    %271 = vmatpush.xpose.msra.mxu0 0.0
    %272 = vmatpush.xpose.msra.mxu0 0.0
    %273 = vmatpush.xpose.msra.mxu0 0.0
    %274 = vmatpush.xpose.msra.mxu0 0.0
    %275 = vmatpush.xpose.msra.mxu0 %v259
    %276 = vmatpush.xpose.msra.mxu0 %v257
    %277 = vmatmul.f32.gmra.mxu0 %v253
    %v278 = vpop.f32.mrf.mxu0
    %v279 = vadd.f32 %v244, %v278
    %280 = vmatmul.f32.gmra.mxu0 %v255
    %v281 = vpop.f32.mrf.mxu0
    %v282 = vadd.f32 %v245, %v281
    %283 = vdwg.mxu0
    %vm284 = vcmask 130048
    %v285 = vsel %vm284, %v279, -inf
    %286 = vmax.xlane.f32.xlu0 %v285
    %v287 = vpop.xlane.xlu0 %286
    %v288 = vsel %vm284, %v282, -inf
    %289 = vmax.xlane.f32.xlu0 %v288
    %v290 = vpop.xlane.xlu0 %289
    %v291 = vsub.f32 %v279, %v287
    %v292 = vsub.f32 %v282, %v290
    %v293 = vmul.f32 %v291, 1.442695
    %v294 = vpow.pop %v293
    %v295 = vmul.f32 %v292, 1.442695
    %v296 = vpow.pop %v295
    %v297 = vsel %vm284, %v294, 0.0
    %298 = vadd.xlane.f32.xlu0 %v297
    %v299 = vpop.xlane.xlu0 %298
    %v300 = vsel %vm284, %v296, 0.0
    %301 = vadd.xlane.f32.xlu0 %v300
    %v302 = vpop.xlane.xlu0 %301
    %v303 = vrcp.pop %v299
    %v304 = vrcp.pop %v302
    %v305 = vmul.f32 %v294, %v303
    %v306 = vmul.f32 %v296, %v304
    %307 = vrot.lane.b32.xlu0 %v170, 124
    %v308 = vpop.permute.xlu0 %307
    %309 = vrot.lane.b32.xlu0 %v173, 124
    %v310 = vpop.permute.xlu0 %309
    %311 = vrot.lane.b32.xlu0 %v170, 84
    %v312 = vpop.permute.xlu0 %311
    %313 = vrot.lane.b32.xlu0 %v173, 84
    %v314 = vpop.permute.xlu0 %313
    %v315 = vsel %vm252, %v308, 0
    %v317 = vsel %vm252, %v310, 0
    %v319 = vsel %vm252, %v312, 0
    %v321 = vsel %vm252, %v314, 0
    %323 = vmatpush.xpose.msra.mxu0 0.0
    %324 = vmatpush.xpose.msra.mxu0 0.0
    %325 = vmatpush.xpose.msra.mxu0 0.0
    %326 = vmatpush.xpose.msra.mxu0 0.0
    %327 = vmatpush.xpose.msra.mxu0 0.0
    %328 = vmatpush.xpose.msra.mxu0 0.0
    %329 = vmatpush.xpose.msra.mxu0 0.0
    %330 = vmatpush.xpose.msra.mxu0 0.0
    %331 = vmatpush.xpose.msra.mxu0 0.0
    %332 = vmatpush.xpose.msra.mxu0 0.0
    %333 = vmatpush.xpose.msra.mxu0 0.0
    %334 = vmatpush.xpose.msra.mxu0 0.0
    %335 = vmatpush.xpose.msra.mxu0 0.0
    %336 = vmatpush.xpose.msra.mxu0 0.0
    %337 = vmatpush.xpose.msra.mxu0 %v321
    %338 = vmatpush.xpose.msra.mxu0 %v319
    %339 = vmatmul.f32.gmra.mxu0 %v315
    %v340 = vpop.f32.mrf.mxu0
    %v341 = vadd.f32 %v244, %v340
    %342 = vmatmul.f32.gmra.mxu0 %v317
    %v343 = vpop.f32.mrf.mxu0
    %v344 = vadd.f32 %v245, %v343
    %345 = vdwg.mxu0
    %v346 = vsel %vm284, %v341, -inf
    %347 = vmax.xlane.f32.xlu0 %v346
    %v348 = vpop.xlane.xlu0 %347
    %v349 = vsel %vm284, %v344, -inf
    %350 = vmax.xlane.f32.xlu0 %v349
    %v351 = vpop.xlane.xlu0 %350
    %v352 = vsub.f32 %v341, %v348
    %v353 = vsub.f32 %v344, %v351
    %v354 = vmul.f32 %v352, 1.442695
    %v355 = vpow.pop %v354
    %v356 = vmul.f32 %v353, 1.442695
    %v357 = vpow.pop %v356
    %v358 = vsel %vm284, %v355, 0.0
    %359 = vadd.xlane.f32.xlu0 %v358
    %v360 = vpop.xlane.xlu0 %359
    %v361 = vsel %vm284, %v357, 0.0
    %362 = vadd.xlane.f32.xlu0 %v361
    %v363 = vpop.xlane.xlu0 %362
    %v364 = vrcp.pop %v360
    %v365 = vrcp.pop %v363
    %v366 = vmul.f32 %v355, %v364
    %v367 = vmul.f32 %v357, %v365
    %368 = vrot.lane.b32.xlu0 %v170, 120
    %v369 = vpop.permute.xlu0 %368
    %370 = vrot.lane.b32.xlu0 %v173, 120
    %v371 = vpop.permute.xlu0 %370
    %372 = vrot.lane.b32.xlu0 %v170, 80
    %v373 = vpop.permute.xlu0 %372
    %374 = vrot.lane.b32.xlu0 %v173, 80
    %v375 = vpop.permute.xlu0 %374
    %v376 = vsel %vm252, %v369, 0
    %v378 = vsel %vm252, %v371, 0
    %v380 = vsel %vm252, %v373, 0
    %v382 = vsel %vm252, %v375, 0
    %384 = vmatpush.xpose.msra.mxu0 0.0
    %385 = vmatpush.xpose.msra.mxu0 0.0
    %386 = vmatpush.xpose.msra.mxu0 0.0
    %387 = vmatpush.xpose.msra.mxu0 0.0
    %388 = vmatpush.xpose.msra.mxu0 0.0
    %389 = vmatpush.xpose.msra.mxu0 0.0
    %390 = vmatpush.xpose.msra.mxu0 0.0
    %391 = vmatpush.xpose.msra.mxu0 0.0
    %392 = vmatpush.xpose.msra.mxu0 0.0
    %393 = vmatpush.xpose.msra.mxu0 0.0
    %394 = vmatpush.xpose.msra.mxu0 0.0
    %395 = vmatpush.xpose.msra.mxu0 0.0
    %396 = vmatpush.xpose.msra.mxu0 0.0
    %397 = vmatpush.xpose.msra.mxu0 0.0
    %398 = vmatpush.xpose.msra.mxu0 %v382
    %399 = vmatpush.xpose.msra.mxu0 %v380
    %400 = vmatmul.f32.gmra.mxu0 %v376
    %v401 = vpop.f32.mrf.mxu0
    %v402 = vadd.f32 %v244, %v401
    %403 = vmatmul.f32.gmra.mxu0 %v378
    %v404 = vpop.f32.mrf.mxu0
    %v405 = vadd.f32 %v245, %v404
    %406 = vdwg.mxu0
    %v407 = vsel %vm284, %v402, -inf
    %408 = vmax.xlane.f32.xlu0 %v407
    %v409 = vpop.xlane.xlu0 %408
    %v410 = vsel %vm284, %v405, -inf
    %411 = vmax.xlane.f32.xlu0 %v410
    %v412 = vpop.xlane.xlu0 %411
    %v413 = vsub.f32 %v402, %v409
    %v414 = vsub.f32 %v405, %v412
    %v415 = vmul.f32 %v413, 1.442695
    %v416 = vpow.pop %v415
    %v417 = vmul.f32 %v414, 1.442695
    %v418 = vpow.pop %v417
    %v419 = vsel %vm284, %v416, 0.0
    %420 = vadd.xlane.f32.xlu0 %v419
    %v421 = vpop.xlane.xlu0 %420
    %v422 = vsel %vm284, %v418, 0.0
    %423 = vadd.xlane.f32.xlu0 %v422
    %v424 = vpop.xlane.xlu0 %423
    %v425 = vrcp.pop %v421
    %v426 = vrcp.pop %v424
    %v427 = vmul.f32 %v416, %v425
    %v428 = vmul.f32 %v418, %v426
    %429 = vrot.lane.b32.xlu0 %v170, 116
    %v430 = vpop.permute.xlu0 %429
    %431 = vrot.lane.b32.xlu0 %v173, 116
    %v432 = vpop.permute.xlu0 %431
    %433 = vrot.lane.b32.xlu0 %v170, 76
    %v434 = vpop.permute.xlu0 %433
    %435 = vrot.lane.b32.xlu0 %v173, 76
    %v436 = vpop.permute.xlu0 %435
    %v437 = vsel %vm252, %v430, 0
    %v439 = vsel %vm252, %v432, 0
    %v441 = vsel %vm252, %v434, 0
    %v443 = vsel %vm252, %v436, 0
    %445 = vmatpush.xpose.msra.mxu0 0.0
    %446 = vmatpush.xpose.msra.mxu0 0.0
    %447 = vmatpush.xpose.msra.mxu0 0.0
    %448 = vmatpush.xpose.msra.mxu0 0.0
    %449 = vmatpush.xpose.msra.mxu0 0.0
    %450 = vmatpush.xpose.msra.mxu0 0.0
    %451 = vmatpush.xpose.msra.mxu0 0.0
    %452 = vmatpush.xpose.msra.mxu0 0.0
    %453 = vmatpush.xpose.msra.mxu0 0.0
    %454 = vmatpush.xpose.msra.mxu0 0.0
    %455 = vmatpush.xpose.msra.mxu0 0.0
    %456 = vmatpush.xpose.msra.mxu0 0.0
    %457 = vmatpush.xpose.msra.mxu0 0.0
    %458 = vmatpush.xpose.msra.mxu0 0.0
    %459 = vmatpush.xpose.msra.mxu0 %v443
    %460 = vmatpush.xpose.msra.mxu0 %v441
    %461 = vmatmul.f32.gmra.mxu0 %v437
    %v462 = vpop.f32.mrf.mxu0
    %v463 = vadd.f32 %v244, %v462
    %464 = vmatmul.f32.gmra.mxu0 %v439
    %v465 = vpop.f32.mrf.mxu0
    %v466 = vadd.f32 %v245, %v465
    %467 = vdwg.mxu0
    %v468 = vsel %vm284, %v463, -inf
    %469 = vmax.xlane.f32.xlu0 %v468
    %v470 = vpop.xlane.xlu0 %469
    %v471 = vsel %vm284, %v466, -inf
    %472 = vmax.xlane.f32.xlu0 %v471
    %v473 = vpop.xlane.xlu0 %472
    %v474 = vsub.f32 %v463, %v470
    %v475 = vsub.f32 %v466, %v473
    %v476 = vmul.f32 %v474, 1.442695
    %v477 = vpow.pop %v476
    %v478 = vmul.f32 %v475, 1.442695
    %v479 = vpow.pop %v478
    %v480 = vsel %vm284, %v477, 0.0
    %481 = vadd.xlane.f32.xlu0 %v480
    %v482 = vpop.xlane.xlu0 %481
    %v483 = vsel %vm284, %v479, 0.0
    %484 = vadd.xlane.f32.xlu0 %v483
    %v485 = vpop.xlane.xlu0 %484
    %v486 = vrcp.pop %v482
    %v487 = vrcp.pop %v485
    %v488 = vmul.f32 %v477, %v486
    %v489 = vmul.f32 %v479, %v487
    %490 = vrot.lane.b32.xlu0 %v170, 112
    %v491 = vpop.permute.xlu0 %490
    %492 = vrot.lane.b32.xlu0 %v173, 112
    %v493 = vpop.permute.xlu0 %492
    %494 = vrot.lane.b32.xlu0 %v170, 72
    %v495 = vpop.permute.xlu0 %494
    %496 = vrot.lane.b32.xlu0 %v173, 72
    %v497 = vpop.permute.xlu0 %496
    %v498 = vsel %vm252, %v491, 0
    %v500 = vsel %vm252, %v493, 0
    %v502 = vsel %vm252, %v495, 0
    %v504 = vsel %vm252, %v497, 0
    %506 = vmatpush.xpose.msra.mxu0 0.0
    %507 = vmatpush.xpose.msra.mxu0 0.0
    %508 = vmatpush.xpose.msra.mxu0 0.0
    %509 = vmatpush.xpose.msra.mxu0 0.0
    %510 = vmatpush.xpose.msra.mxu0 0.0
    %511 = vmatpush.xpose.msra.mxu0 0.0
    %512 = vmatpush.xpose.msra.mxu0 0.0
    %513 = vmatpush.xpose.msra.mxu0 0.0
    %514 = vmatpush.xpose.msra.mxu0 0.0
    %515 = vmatpush.xpose.msra.mxu0 0.0
    %516 = vmatpush.xpose.msra.mxu0 0.0
    %517 = vmatpush.xpose.msra.mxu0 0.0
    %518 = vmatpush.xpose.msra.mxu0 0.0
    %519 = vmatpush.xpose.msra.mxu0 0.0
    %520 = vmatpush.xpose.msra.mxu0 %v504
    %521 = vmatpush.xpose.msra.mxu0 %v502
    %522 = vmatmul.f32.gmra.mxu0 %v498
    %v523 = vpop.f32.mrf.mxu0
    %v524 = vadd.f32 %v244, %v523
    %525 = vmatmul.f32.gmra.mxu0 %v500
    %v526 = vpop.f32.mrf.mxu0
    %v527 = vadd.f32 %v245, %v526
    %528 = vdwg.mxu0
    %v529 = vsel %vm284, %v524, -inf
    %530 = vmax.xlane.f32.xlu0 %v529
    %v531 = vpop.xlane.xlu0 %530
    %v532 = vsel %vm284, %v527, -inf
    %533 = vmax.xlane.f32.xlu0 %v532
    %v534 = vpop.xlane.xlu0 %533
    %v535 = vsub.f32 %v524, %v531
    %v536 = vsub.f32 %v527, %v534
    %v537 = vmul.f32 %v535, 1.442695
    %v538 = vpow.pop %v537
    %v539 = vmul.f32 %v536, 1.442695
    %v540 = vpow.pop %v539
    %v541 = vsel %vm284, %v538, 0.0
    %542 = vadd.xlane.f32.xlu0 %v541
    %v543 = vpop.xlane.xlu0 %542
    %v544 = vsel %vm284, %v540, 0.0
    %545 = vadd.xlane.f32.xlu0 %v544
    %v546 = vpop.xlane.xlu0 %545
    %v547 = vrcp.pop %v543
    %v548 = vrcp.pop %v546
    %v549 = vmul.f32 %v538, %v547
    %v550 = vmul.f32 %v540, %v548
    %551 = vrot.lane.b32.xlu0 %v170, 108
    %v552 = vpop.permute.xlu0 %551
    %553 = vrot.lane.b32.xlu0 %v173, 108
    %v554 = vpop.permute.xlu0 %553
    %555 = vrot.lane.b32.xlu0 %v170, 68
    %v556 = vpop.permute.xlu0 %555
    %557 = vrot.lane.b32.xlu0 %v173, 68
    %v558 = vpop.permute.xlu0 %557
    %v559 = vsel %vm252, %v552, 0
    %v561 = vsel %vm252, %v554, 0
    %v563 = vsel %vm252, %v556, 0
    %v565 = vsel %vm252, %v558, 0
    %567 = vmatpush.xpose.msra.mxu0 0.0
    %568 = vmatpush.xpose.msra.mxu0 0.0
    %569 = vmatpush.xpose.msra.mxu0 0.0
    %570 = vmatpush.xpose.msra.mxu0 0.0
    %571 = vmatpush.xpose.msra.mxu0 0.0
    %572 = vmatpush.xpose.msra.mxu0 0.0
    %573 = vmatpush.xpose.msra.mxu0 0.0
    %574 = vmatpush.xpose.msra.mxu0 0.0
    %575 = vmatpush.xpose.msra.mxu0 0.0
    %576 = vmatpush.xpose.msra.mxu0 0.0
    %577 = vmatpush.xpose.msra.mxu0 0.0
    %578 = vmatpush.xpose.msra.mxu0 0.0
    %579 = vmatpush.xpose.msra.mxu0 0.0
    %580 = vmatpush.xpose.msra.mxu0 0.0
    %581 = vmatpush.xpose.msra.mxu0 %v565
    %582 = vmatpush.xpose.msra.mxu0 %v563
    %583 = vmatmul.f32.gmra.mxu0 %v559
    %v584 = vpop.f32.mrf.mxu0
    %v585 = vadd.f32 %v244, %v584
    %586 = vmatmul.f32.gmra.mxu0 %v561
    %v587 = vpop.f32.mrf.mxu0
    %v588 = vadd.f32 %v245, %v587
    %589 = vdwg.mxu0
    %v590 = vsel %vm284, %v585, -inf
    %591 = vmax.xlane.f32.xlu0 %v590
    %v592 = vpop.xlane.xlu0 %591
    %v593 = vsel %vm284, %v588, -inf
    %594 = vmax.xlane.f32.xlu0 %v593
    %v595 = vpop.xlane.xlu0 %594
    %v596 = vsub.f32 %v585, %v592
    %v597 = vsub.f32 %v588, %v595
    %v598 = vmul.f32 %v596, 1.442695
    %v599 = vpow.pop %v598
    %v600 = vmul.f32 %v597, 1.442695
    %v601 = vpow.pop %v600
    %v602 = vsel %vm284, %v599, 0.0
    %603 = vadd.xlane.f32.xlu0 %v602
    %v604 = vpop.xlane.xlu0 %603
    %v605 = vsel %vm284, %v601, 0.0
    %606 = vadd.xlane.f32.xlu0 %v605
    %v607 = vpop.xlane.xlu0 %606
    %v608 = vrcp.pop %v604
    %v609 = vrcp.pop %v607
    %v610 = vmul.f32 %v599, %v608
    %v611 = vmul.f32 %v601, %v609
    %612 = vrot.lane.b32.xlu0 %v170, 104
    %v613 = vpop.permute.xlu0 %612
    %614 = vrot.lane.b32.xlu0 %v173, 104
    %v615 = vpop.permute.xlu0 %614
    %616 = vrot.lane.b32.xlu0 %v170, 64
    %v617 = vpop.permute.xlu0 %616
    %618 = vrot.lane.b32.xlu0 %v173, 64
    %v619 = vpop.permute.xlu0 %618
    %v620 = vsel %vm252, %v613, 0
    %v622 = vsel %vm252, %v615, 0
    %v624 = vsel %vm252, %v617, 0
    %v626 = vsel %vm252, %v619, 0
    %628 = vmatpush.xpose.msra.mxu0 0.0
    %629 = vmatpush.xpose.msra.mxu0 0.0
    %630 = vmatpush.xpose.msra.mxu0 0.0
    %631 = vmatpush.xpose.msra.mxu0 0.0
    %632 = vmatpush.xpose.msra.mxu0 0.0
    %633 = vmatpush.xpose.msra.mxu0 0.0
    %634 = vmatpush.xpose.msra.mxu0 0.0
    %635 = vmatpush.xpose.msra.mxu0 0.0
    %636 = vmatpush.xpose.msra.mxu0 0.0
    %637 = vmatpush.xpose.msra.mxu0 0.0
    %638 = vmatpush.xpose.msra.mxu0 0.0
    %639 = vmatpush.xpose.msra.mxu0 0.0
    %640 = vmatpush.xpose.msra.mxu0 0.0
    %641 = vmatpush.xpose.msra.mxu0 0.0
    %642 = vmatpush.xpose.msra.mxu0 %v626
    %643 = vmatpush.xpose.msra.mxu0 %v624
    %644 = vmatmul.f32.gmra.mxu0 %v620
    %v645 = vpop.f32.mrf.mxu0
    %v646 = vadd.f32 %v244, %v645
    %647 = vmatmul.f32.gmra.mxu0 %v622
    %v648 = vpop.f32.mrf.mxu0
    %v649 = vadd.f32 %v245, %v648
    %650 = vdwg.mxu0
    %v651 = vsel %vm284, %v646, -inf
    %652 = vmax.xlane.f32.xlu0 %v651
    %v653 = vpop.xlane.xlu0 %652
    %v654 = vsel %vm284, %v649, -inf
    %655 = vmax.xlane.f32.xlu0 %v654
    %v656 = vpop.xlane.xlu0 %655
    %v657 = vsub.f32 %v646, %v653
    %v658 = vsub.f32 %v649, %v656
    %v659 = vmul.f32 %v657, 1.442695
    %v660 = vpow.pop %v659
    %v661 = vmul.f32 %v658, 1.442695
    %v662 = vpow.pop %v661
    %v663 = vsel %vm284, %v660, 0.0
    %664 = vadd.xlane.f32.xlu0 %v663
    %v665 = vpop.xlane.xlu0 %664
    %v666 = vsel %vm284, %v662, 0.0
    %667 = vadd.xlane.f32.xlu0 %v666
    %v668 = vpop.xlane.xlu0 %667
    %v669 = vrcp.pop %v665
    %v670 = vrcp.pop %v668
    %v671 = vmul.f32 %v660, %v669
    %v672 = vmul.f32 %v662, %v670
    %673 = vrot.lane.b32.xlu0 %v170, 100
    %v674 = vpop.permute.xlu0 %673
    %675 = vrot.lane.b32.xlu0 %v173, 100
    %v676 = vpop.permute.xlu0 %675
    %677 = vrot.lane.b32.xlu0 %v170, 60
    %v678 = vpop.permute.xlu0 %677
    %679 = vrot.lane.b32.xlu0 %v173, 60
    %v680 = vpop.permute.xlu0 %679
    %v681 = vsel %vm252, %v674, 0
    %v683 = vsel %vm252, %v676, 0
    %v685 = vsel %vm252, %v678, 0
    %v687 = vsel %vm252, %v680, 0
    %689 = vmatpush.xpose.msra.mxu0 0.0
    %690 = vmatpush.xpose.msra.mxu0 0.0
    %691 = vmatpush.xpose.msra.mxu0 0.0
    %692 = vmatpush.xpose.msra.mxu0 0.0
    %693 = vmatpush.xpose.msra.mxu0 0.0
    %694 = vmatpush.xpose.msra.mxu0 0.0
    %695 = vmatpush.xpose.msra.mxu0 0.0
    %696 = vmatpush.xpose.msra.mxu0 0.0
    %697 = vmatpush.xpose.msra.mxu0 0.0
    %698 = vmatpush.xpose.msra.mxu0 0.0
    %699 = vmatpush.xpose.msra.mxu0 0.0
    %700 = vmatpush.xpose.msra.mxu0 0.0
    %701 = vmatpush.xpose.msra.mxu0 0.0
    %702 = vmatpush.xpose.msra.mxu0 0.0
    %703 = vmatpush.xpose.msra.mxu0 %v687
    %704 = vmatpush.xpose.msra.mxu0 %v685
    %705 = vmatmul.f32.gmra.mxu0 %v681
    %v706 = vpop.f32.mrf.mxu0
    %v707 = vadd.f32 %v244, %v706
    %708 = vmatmul.f32.gmra.mxu0 %v683
    %v709 = vpop.f32.mrf.mxu0
    %v710 = vadd.f32 %v245, %v709
    %711 = vdwg.mxu0
    %v712 = vsel %vm284, %v707, -inf
    %713 = vmax.xlane.f32.xlu0 %v712
    %v714 = vpop.xlane.xlu0 %713
    %v715 = vsel %vm284, %v710, -inf
    %716 = vmax.xlane.f32.xlu0 %v715
    %v717 = vpop.xlane.xlu0 %716
    %v718 = vsub.f32 %v707, %v714
    %v719 = vsub.f32 %v710, %v717
    %v720 = vmul.f32 %v718, 1.442695
    %v721 = vpow.pop %v720
    %v722 = vmul.f32 %v719, 1.442695
    %v723 = vpow.pop %v722
    %v724 = vsel %vm284, %v721, 0.0
    %725 = vadd.xlane.f32.xlu0 %v724
    %v726 = vpop.xlane.xlu0 %725
    %v727 = vsel %vm284, %v723, 0.0
    %728 = vadd.xlane.f32.xlu0 %v727
    %v729 = vpop.xlane.xlu0 %728
    %v730 = vrcp.pop %v726
    %v731 = vrcp.pop %v729
    %v732 = vmul.f32 %v721, %v730
    %v733 = vmul.f32 %v723, %v731
    %734 = vrot.lane.b32.xlu0 %v170, 96
    %v735 = vpop.permute.xlu0 %734
    %736 = vrot.lane.b32.xlu0 %v173, 96
    %v737 = vpop.permute.xlu0 %736
    %738 = vrot.lane.b32.xlu0 %v170, 56
    %v739 = vpop.permute.xlu0 %738
    %740 = vrot.lane.b32.xlu0 %v173, 56
    %v741 = vpop.permute.xlu0 %740
    %v742 = vsel %vm252, %v735, 0
    %v744 = vsel %vm252, %v737, 0
    %v746 = vsel %vm252, %v739, 0
    %v748 = vsel %vm252, %v741, 0
    %750 = vmatpush.xpose.msra.mxu0 0.0
    %751 = vmatpush.xpose.msra.mxu0 0.0
    %752 = vmatpush.xpose.msra.mxu0 0.0
    %753 = vmatpush.xpose.msra.mxu0 0.0
    %754 = vmatpush.xpose.msra.mxu0 0.0
    %755 = vmatpush.xpose.msra.mxu0 0.0
    %756 = vmatpush.xpose.msra.mxu0 0.0
    %757 = vmatpush.xpose.msra.mxu0 0.0
    %758 = vmatpush.xpose.msra.mxu0 0.0
    %759 = vmatpush.xpose.msra.mxu0 0.0
    %760 = vmatpush.xpose.msra.mxu0 0.0
    %761 = vmatpush.xpose.msra.mxu0 0.0
    %762 = vmatpush.xpose.msra.mxu0 0.0
    %763 = vmatpush.xpose.msra.mxu0 0.0
    %764 = vmatpush.xpose.msra.mxu0 %v748
    %765 = vmatpush.xpose.msra.mxu0 %v746
    %766 = vmatmul.f32.gmra.mxu0 %v742
    %v767 = vpop.f32.mrf.mxu0
    %v768 = vadd.f32 %v244, %v767
    %769 = vmatmul.f32.gmra.mxu0 %v744
    %v770 = vpop.f32.mrf.mxu0
    %v771 = vadd.f32 %v245, %v770
    %772 = vdwg.mxu0
    %v773 = vsel %vm284, %v768, -inf
    %774 = vmax.xlane.f32.xlu0 %v773
    %v775 = vpop.xlane.xlu0 %774
    %v776 = vsel %vm284, %v771, -inf
    %777 = vmax.xlane.f32.xlu0 %v776
    %v778 = vpop.xlane.xlu0 %777
    %v779 = vsub.f32 %v768, %v775
    %v780 = vsub.f32 %v771, %v778
    %v781 = vmul.f32 %v779, 1.442695
    %v782 = vpow.pop %v781
    %v783 = vmul.f32 %v780, 1.442695
    %v784 = vpow.pop %v783
    %v785 = vsel %vm284, %v782, 0.0
    %786 = vadd.xlane.f32.xlu0 %v785
    %v787 = vpop.xlane.xlu0 %786
    %v788 = vsel %vm284, %v784, 0.0
    %789 = vadd.xlane.f32.xlu0 %v788
    %v790 = vpop.xlane.xlu0 %789
    %v791 = vrcp.pop %v787
    %v792 = vrcp.pop %v790
    %v793 = vmul.f32 %v782, %v791
    %v794 = vmul.f32 %v784, %v792
    %795 = vrot.lane.b32.xlu0 %v170, 92
    %v796 = vpop.permute.xlu0 %795
    %797 = vrot.lane.b32.xlu0 %v173, 92
    %v798 = vpop.permute.xlu0 %797
    %799 = vrot.lane.b32.xlu0 %v170, 52
    %v800 = vpop.permute.xlu0 %799
    %801 = vrot.lane.b32.xlu0 %v173, 52
    %v802 = vpop.permute.xlu0 %801
    %v803 = vsel %vm252, %v796, 0
    %v805 = vsel %vm252, %v798, 0
    %v807 = vsel %vm252, %v800, 0
    %v809 = vsel %vm252, %v802, 0
    %811 = vmatpush.xpose.msra.mxu0 0.0
    %812 = vmatpush.xpose.msra.mxu0 0.0
    %813 = vmatpush.xpose.msra.mxu0 0.0
    %814 = vmatpush.xpose.msra.mxu0 0.0
    %815 = vmatpush.xpose.msra.mxu0 0.0
    %816 = vmatpush.xpose.msra.mxu0 0.0
    %817 = vmatpush.xpose.msra.mxu0 0.0
    %818 = vmatpush.xpose.msra.mxu0 0.0
    %819 = vmatpush.xpose.msra.mxu0 0.0
    %820 = vmatpush.xpose.msra.mxu0 0.0
    %821 = vmatpush.xpose.msra.mxu0 0.0
    %822 = vmatpush.xpose.msra.mxu0 0.0
    %823 = vmatpush.xpose.msra.mxu0 0.0
    %824 = vmatpush.xpose.msra.mxu0 0.0
    %825 = vmatpush.xpose.msra.mxu0 %v809
    %826 = vmatpush.xpose.msra.mxu0 %v807
    %827 = vmatmul.f32.gmra.mxu0 %v803
    %v828 = vpop.f32.mrf.mxu0
    %v829 = vadd.f32 %v244, %v828
    %830 = vmatmul.f32.gmra.mxu0 %v805
    %v831 = vpop.f32.mrf.mxu0
    %v832 = vadd.f32 %v245, %v831
    %833 = vdwg.mxu0
    %v834 = vsel %vm284, %v829, -inf
    %835 = vmax.xlane.f32.xlu0 %v834
    %v836 = vpop.xlane.xlu0 %835
    %v837 = vsel %vm284, %v832, -inf
    %838 = vmax.xlane.f32.xlu0 %v837
    %v839 = vpop.xlane.xlu0 %838
    %v840 = vsub.f32 %v829, %v836
    %v841 = vsub.f32 %v832, %v839
    %v842 = vmul.f32 %v840, 1.442695
    %v843 = vpow.pop %v842
    %v844 = vmul.f32 %v841, 1.442695
    %v845 = vpow.pop %v844
    %v846 = vsel %vm284, %v843, 0.0
    %847 = vadd.xlane.f32.xlu0 %v846
    %v848 = vpop.xlane.xlu0 %847
    %v849 = vsel %vm284, %v845, 0.0
    %850 = vadd.xlane.f32.xlu0 %v849
    %v851 = vpop.xlane.xlu0 %850
    %v852 = vrcp.pop %v848
    %v853 = vrcp.pop %v851
    %v854 = vmul.f32 %v843, %v852
    %v855 = vmul.f32 %v845, %v853
    %858 = vrot.lane.b32.xlu0 %v366, 16
    %v859 = vpop.permute.xlu0 %858
    %860 = vrot.lane.b32.xlu0 %v367, 16
    %v861 = vpop.permute.xlu0 %860
    %866 = vrot.lane.b32.xlu0 %v427, 32
    %v867 = vpop.permute.xlu0 %866
    %868 = vrot.lane.b32.xlu0 %v428, 32
    %v869 = vpop.permute.xlu0 %868
    %874 = vrot.lane.b32.xlu0 %v488, 48
    %v875 = vpop.permute.xlu0 %874
    %876 = vrot.lane.b32.xlu0 %v489, 48
    %v877 = vpop.permute.xlu0 %876
    %882 = vrot.lane.b32.xlu0 %v549, 64
    %v883 = vpop.permute.xlu0 %882
    %884 = vrot.lane.b32.xlu0 %v550, 64
    %v885 = vpop.permute.xlu0 %884
    %890 = vrot.lane.b32.xlu0 %v610, 80
    %v891 = vpop.permute.xlu0 %890
    %892 = vrot.lane.b32.xlu0 %v611, 80
    %v893 = vpop.permute.xlu0 %892
    %898 = vrot.lane.b32.xlu0 %v671, 96
    %v899 = vpop.permute.xlu0 %898
    %900 = vrot.lane.b32.xlu0 %v672, 96
    %v901 = vpop.permute.xlu0 %900
    %906 = vrot.lane.b32.xlu0 %v732, 112
    %v907 = vpop.permute.xlu0 %906
    %908 = vrot.lane.b32.xlu0 %v733, 112
    %v909 = vpop.permute.xlu0 %908
    %914 = vrot.lane.b32.xlu0 %v854, 16
    %v915 = vpop.permute.xlu0 %914
    %916 = vrot.lane.b32.xlu0 %v855, 16
    %v917 = vpop.permute.xlu0 %916
    %v920 = vsel %vm284, %v305, %v859
    %v921 = vsel %vm284, %v306, %v861
    %vm922 = vcmask 261120
    %v923 = vsel %vm922, %v920, %v867
    %v924 = vsel %vm922, %v921, %v869
    %vm925 = vcmask 392192
    %v926 = vsel %vm925, %v923, %v875
    %v927 = vsel %vm925, %v924, %v877
    %vm928 = vcmask 523264
    %v929 = vsel %vm928, %v926, %v883
    %v930 = vsel %vm928, %v927, %v885
    %vm931 = vcmask 654336
    %v932 = vsel %vm931, %v929, %v891
    %v933 = vsel %vm931, %v930, %v893
    %vm934 = vcmask 785408
    %v935 = vsel %vm934, %v932, %v899
    %v936 = vsel %vm934, %v933, %v901
    %vm937 = vcmask 916480
    %v938 = vsel %vm937, %v935, %v907
    %v939 = vsel %vm937, %v936, %v909
    %v940 = vsel %vm284, %v793, %v915
    %v941 = vsel %vm284, %v794, %v917
    %944 = vrot.lane.b32.xlu0 %v193, 88
    %v945 = vpop.permute.xlu0 %944
    %946 = vrot.lane.b32.xlu0 %v196, 88
    %v947 = vpop.permute.xlu0 %946
    %vm948 = vcmask 719872
    %v949 = vsel %vm948, %v249, %v945
    %v950 = vsel %vm948, %v251, %v947
    %951 = vrot.lane.b32.xlu0 %v193, 48
    %v952 = vpop.permute.xlu0 %951
    %953 = vrot.lane.b32.xlu0 %v196, 48
    %v954 = vpop.permute.xlu0 %953
    %955 = vrot.lane.b32.xlu0 %v193, 8
    %v956 = vpop.permute.xlu0 %955
    %957 = vrot.lane.b32.xlu0 %v196, 8
    %v958 = vpop.permute.xlu0 %957
    %961 = vrot.lane.b32.xlu0 %v193, 96
    %v962 = vpop.permute.xlu0 %961
    %963 = vrot.lane.b32.xlu0 %v216, 96
    %v964 = vpop.permute.xlu0 %963
    %965 = vrot.lane.b32.xlu0 %v196, 96
    %v966 = vpop.permute.xlu0 %965
    %967 = vrot.lane.b32.xlu0 %v219, 96
    %v968 = vpop.permute.xlu0 %967
    %v969 = vsel %vm934, %v962, %v964
    %v970 = vsel %vm934, %v966, %v968
    %971 = vrot.lane.b32.xlu0 %v216, 56
    %v972 = vpop.permute.xlu0 %971
    %973 = vrot.lane.b32.xlu0 %v219, 56
    %v974 = vpop.permute.xlu0 %973
    %975 = vrot.lane.b32.xlu0 %v216, 16
    %v976 = vpop.permute.xlu0 %975
    %977 = vrot.lane.b32.xlu0 %v219, 16
    %v978 = vpop.permute.xlu0 %977
    %981 = vrot.lane.b32.xlu0 %v216, 104
    %v982 = vpop.permute.xlu0 %981
    %983 = vrot.lane.b32.xlu0 %v239, 104
    %v984 = vpop.permute.xlu0 %983
    %985 = vrot.lane.b32.xlu0 %v219, 104
    %v986 = vpop.permute.xlu0 %985
    %987 = vrot.lane.b32.xlu0 %v242, 104
    %v988 = vpop.permute.xlu0 %987
    %vm989 = vcmask 850944
    %v990 = vsel %vm989, %v982, %v984
    %v991 = vsel %vm989, %v986, %v988
    %992 = vrot.lane.b32.xlu0 %v239, 64
    %v993 = vpop.permute.xlu0 %992
    %994 = vrot.lane.b32.xlu0 %v242, 64
    %v995 = vpop.permute.xlu0 %994
    %996 = vrot.lane.b32.xlu0 %v239, 24
    %v997 = vpop.permute.xlu0 %996
    %998 = vrot.lane.b32.xlu0 %v242, 24
    %v999 = vpop.permute.xlu0 %998
    %v1000 = vld [vmem:[#allocation7 + $0x25] sm:$0x1]
    %v1001 = vperm.slane %v1000, 0
    %1002 = vrot.lane.b32.xlu0 %v170, 48
    %v1003 = vpop.permute.xlu0 %1002
    %1004 = vrot.lane.b32.xlu0 %v173, 48
    %v1005 = vpop.permute.xlu0 %1004
    %1006 = vrot.lane.b32.xlu0 %v949, 48
    %v1007 = vpop.permute.xlu0 %1006
    %1008 = vrot.lane.b32.xlu0 %v950, 48
    %v1009 = vpop.permute.xlu0 %1008
    %1010 = vrot.lane.b32.xlu0 %v952, 48
    %v1011 = vpop.permute.xlu0 %1010
    %1012 = vrot.lane.b32.xlu0 %v954, 48
    %v1013 = vpop.permute.xlu0 %1012
    %1014 = vrot.lane.b32.xlu0 %v956, 48
    %v1015 = vpop.permute.xlu0 %1014
    %1016 = vrot.lane.b32.xlu0 %v958, 48
    %v1017 = vpop.permute.xlu0 %1016
    %1018 = vrot.lane.b32.xlu0 %v969, 48
    %v1019 = vpop.permute.xlu0 %1018
    %1020 = vrot.lane.b32.xlu0 %v970, 48
    %v1021 = vpop.permute.xlu0 %1020
    %1022 = vrot.lane.b32.xlu0 %v972, 48
    %v1023 = vpop.permute.xlu0 %1022
    %1024 = vrot.lane.b32.xlu0 %v974, 48
    %v1025 = vpop.permute.xlu0 %1024
    %1026 = vrot.lane.b32.xlu0 %v976, 48
    %v1027 = vpop.permute.xlu0 %1026
    %1028 = vrot.lane.b32.xlu0 %v978, 48
    %v1029 = vpop.permute.xlu0 %1028
    %1030 = vrot.lane.b32.xlu0 %v990, 48
    %v1031 = vpop.permute.xlu0 %1030
    %1032 = vrot.lane.b32.xlu0 %v991, 48
    %v1033 = vpop.permute.xlu0 %1032
    %1034 = vrot.lane.b32.xlu0 %v993, 48
    %v1035 = vpop.permute.xlu0 %1034
    %1036 = vrot.lane.b32.xlu0 %v995, 48
    %v1037 = vpop.permute.xlu0 %1036
    %1038 = vrot.lane.b32.xlu0 %v997, 48
    %v1039 = vpop.permute.xlu0 %1038
    %1040 = vrot.lane.b32.xlu0 %v999, 48
    %v1041 = vpop.permute.xlu0 %1040
    %v1063 = vsel %vm922, %v940, 0
    %v1066 = vsel %vm922, %v941, 0
    %1068 = vmatpush.msra.mxu0 %v1033
    %1069 = vmatpush.msra.mxu0 %v1031
    %1070 = vmatpush.msra.mxu0 %v1029
    %1071 = vmatpush.msra.mxu0 %v1027
    %1072 = vmatpush.msra.mxu0 %v1025
    %1073 = vmatpush.msra.mxu0 %v1023
    %1074 = vmatpush.msra.mxu0 %v1021
    %1075 = vmatpush.msra.mxu0 %v1019
    %1076 = vmatpush.msra.mxu0 %v1017
    %1077 = vmatpush.msra.mxu0 %v1015
    %1078 = vmatpush.msra.mxu0 %v1013
    %1079 = vmatpush.msra.mxu0 %v1011
    %1080 = vmatpush.msra.mxu0 %v1009
    %1081 = vmatpush.msra.mxu0 %v1007
    %1082 = vmatpush.msra.mxu0 %v1005
    %1083 = vmatpush.msra.mxu0 %v1003
    %1084 = vmatmul.f32.gmra.mxu0 %v938
    %v1085 = vpop.f32.mrf.mxu0
    %v1086 = vadd.f32 %v1001, %v1085
    %1087 = vmatmul.f32.gmra.mxu0 %v939
    %v1088 = vpop.f32.mrf.mxu0
    %v1089 = vadd.f32 %v1001, %v1088
    %1090 = vdwg.mxu0
    %1091 = vmatpush.msra.mxu0 0.0
    %1092 = vmatpush.msra.mxu0 0.0
    %1093 = vmatpush.msra.mxu0 0.0
    %1094 = vmatpush.msra.mxu0 0.0
    %1095 = vmatpush.msra.mxu0 0.0
    %1096 = vmatpush.msra.mxu0 0.0
    %1097 = vmatpush.msra.mxu0 0.0
    %1098 = vmatpush.msra.mxu0 0.0
    %1099 = vmatpush.msra.mxu0 0.0
    %1100 = vmatpush.msra.mxu0 0.0
    %1101 = vmatpush.msra.mxu0 0.0
    %1102 = vmatpush.msra.mxu0 0.0
    %1103 = vmatpush.msra.mxu0 %v1041
    %1104 = vmatpush.msra.mxu0 %v1039
    %1105 = vmatpush.msra.mxu0 %v1037
    %1106 = vmatpush.msra.mxu0 %v1035
    %1107 = vmatmul.f32.gmra.mxu0 %v1063
    %v1108 = vpop.f32.mrf.mxu0
    %v1109 = vadd.f32 %v1086, %v1108
    %1110 = vmatmul.f32.gmra.mxu0 %v1066
    %v1111 = vpop.f32.mrf.mxu0
    %v1112 = vadd.f32 %v1089, %v1111
    %1113 = vdwg.mxu0
    %v1114 = vadd.f32 %v112, %v1109
    %v1115 = vadd.f32 %v113, %v1112
    %v1116 = vld [vmem:[#allocation7 + $0x20] sm:$0x1]
    %v1117 = vld [vmem:[#allocation7 + $0x21] sm:$0x1]
    %v1118 = vsel %vm145, %v1114, 0.0
    %1119 = vadd.xlane.f32.xlu0 %v1118
    %v1120 = vpop.xlane.xlu0 %1119
    %v1121 = vsel %vm145, %v1115, 0.0
    %1122 = vadd.xlane.f32.xlu0 %v1121
    %v1123 = vpop.xlane.xlu0 %1122
    %v1124 = vrcp.pop 40.0
    %v1125 = vmul.f32 40.0, %v1124
    %v1126 = vsub.f32 1.0, %v1125
    %v1127 = vmul.f32 %v1124, %v1126
    %v1128 = vadd.f32 %v1124, %v1127
    %vm1129 = vweird.f32 %v1124
    %v1130 = vsel %vm1129, %v1124, %v1128
    %v1131 = vmul.f32 %v1120, %v1130
    %v1132 = vmul.f32 %v1123, %v1130
    %v1133 = vsub.f32 %v1114, %v1131
    %v1134 = vsub.f32 %v1115, %v1132
    %v1135 = vmul.f32 %v1133, %v1133
    %v1136 = vmul.f32 %v1134, %v1134
    %v1137 = vsel %vm145, %v1135, 0.0
    %1138 = vadd.xlane.f32.xlu0 %v1137
    %v1139 = vpop.xlane.xlu0 %1138
    %v1140 = vsel %vm145, %v1136, 0.0
    %1141 = vadd.xlane.f32.xlu0 %v1140
    %v1142 = vpop.xlane.xlu0 %1141
    %v1143 = vmul.f32 %v1139, %v1130
    %v1144 = vmul.f32 %v1142, %v1130
    %v1145 = vadd.f32 %v1143, 1e-05
    %v1146 = vadd.f32 %v1144, 1e-05
    %v1147 = vrsqrt.pop %v1145
    %v1148 = vmul.f32 %v1147, %v1145
    %v1149 = vmul.f32 %v1148, %v1147
    %v1150 = vmul.f32 0.5, %v1149
    %v1151 = vsub.f32 1.5, %v1150
    %v1152 = vmul.f32 %v1147, %v1151
    %vm1153 = vweird.f32 %v1145
    %vm1154 = vweird.f32 %v1147
    %vm1155 = vmor %vm1153, %vm1154
    %v1156 = vsel %vm1155, %v1147, %v1152
    %v1157 = vrsqrt.pop %v1146
    %v1158 = vmul.f32 %v1157, %v1146
    %v1159 = vmul.f32 %v1158, %v1157
    %v1160 = vmul.f32 0.5, %v1159
    %v1161 = vsub.f32 1.5, %v1160
    %v1162 = vmul.f32 %v1157, %v1161
    %vm1163 = vweird.f32 %v1146
    %vm1164 = vweird.f32 %v1157
    %vm1165 = vmor %vm1163, %vm1164
    %v1166 = vsel %vm1165, %v1157, %v1162
    %v1167 = vmul.f32 %v1133, %v1156
    %v1168 = vmul.f32 %v1134, %v1166
    %v1169 = vperm.slane %v1116, 0
    %v1170 = vmul.f32 %v1167, %v1169
    %v1171 = vmul.f32 %v1168, %v1169
    %v1172 = vperm.slane %v1117, 0
    %v1173 = vadd.f32 %v1170, %v1172
    %v1174 = vadd.f32 %v1171, %v1172
    %s1175 = smul.u32 4, 5
    %s1176 = smul.u32 %s1175, 16
    %s1177 = sshll.u32 %s1176, 4
    %1178 = dma.done [#allocation4], %s1177
    %v1179 = vpack.c.bf16 %v1174, %v1173
    %v1180 = vld [vmem:[#allocation2] sm:$0xff]
    %v1181 = vld [vmem:[#allocation2 + $0x8] sm:$0xff]
    %v1182 = vld [vmem:[#allocation2 + $0x10] sm:$0xff]
    %v1183 = vld [vmem:[#allocation2 + $0x18] sm:$0xff]
    %v1184 = vld [vmem:[#allocation2 + $0x20] sm:$0xff]
    %v1185 = vld [vmem:[#allocation2 + $0x28] sm:$0xff]
    %v1186 = vld [vmem:[#allocation2 + $0x30] sm:$0xff]
    %v1187 = vld [vmem:[#allocation2 + $0x38] sm:$0xff]
    %v1188 = vld [vmem:[#allocation2 + $0x40] sm:$0xff]
    %v1189 = vld [vmem:[#allocation2 + $0x48] sm:$0xff]
    %v1190 = vld [vmem:[#allocation2 + $0x50] sm:$0xff]
    %v1191 = vld [vmem:[#allocation2 + $0x58] sm:$0xff]
    %v1192 = vld [vmem:[#allocation2 + $0x60] sm:$0xff]
    %v1193 = vld [vmem:[#allocation2 + $0x68] sm:$0xff]
    %v1194 = vld [vmem:[#allocation2 + $0x70] sm:$0xff]
    %v1195 = vld [vmem:[#allocation2 + $0x78] sm:$0xff]
    %v1196 = vld [vmem:[#allocation2 + $0x80] sm:$0xff]
    %v1197 = vld [vmem:[#allocation2 + $0x88] sm:$0xff]
    %v1198 = vld [vmem:[#allocation2 + $0x90] sm:$0xff]
    %v1199 = vld [vmem:[#allocation2 + $0x98] sm:$0xff]
    %v1200 = vld [vmem:[#allocation2 + $0xa0] sm:$0xff]
    %v1201 = vld [vmem:[#allocation2 + $0xa8] sm:$0xff]
    %v1202 = vld [vmem:[#allocation2 + $0xb0] sm:$0xff]
    %v1203 = vld [vmem:[#allocation2 + $0xb8] sm:$0xff]
    %v1204 = vld [vmem:[#allocation2 + $0xc0] sm:$0xff]
    %v1205 = vld [vmem:[#allocation2 + $0xc8] sm:$0xff]
    %v1206 = vld [vmem:[#allocation2 + $0xd0] sm:$0xff]
    %v1207 = vld [vmem:[#allocation2 + $0xd8] sm:$0xff]
    %v1208 = vld [vmem:[#allocation2 + $0xe0] sm:$0xff]
    %v1209 = vld [vmem:[#allocation2 + $0xe8] sm:$0xff]
    %v1210 = vld [vmem:[#allocation2 + $0xf0] sm:$0xff]
    %v1211 = vld [vmem:[#allocation2 + $0xf8] sm:$0xff]
    %v1212 = vld [vmem:[#allocation2 + $0x100] sm:$0xff]
    %v1213 = vld [vmem:[#allocation2 + $0x108] sm:$0xff]
    %v1214 = vld [vmem:[#allocation2 + $0x110] sm:$0xff]
    %v1215 = vld [vmem:[#allocation2 + $0x118] sm:$0xff]
    %v1216 = vld [vmem:[#allocation2 + $0x120] sm:$0xff]
    %v1217 = vld [vmem:[#allocation2 + $0x128] sm:$0xff]
    %v1218 = vld [vmem:[#allocation2 + $0x130] sm:$0xff]
    %v1219 = vld [vmem:[#allocation2 + $0x138] sm:$0xff]
    %v1220 = vld [vmem:[#allocation10] sm:$0xff]
    %v1221 = vld [vmem:[#allocation10 + $0x8] sm:$0xff]
    %v1224 = vperm.slane %v1220, 0
    %v1225 = vperm.slane %v1220, 1
    %v1226 = vperm.slane %v1220, 2
    %v1227 = vperm.slane %v1220, 3
    %v1228 = vperm.slane %v1220, 4
    %v1229 = vperm.slane %v1220, 5
    %v1230 = vperm.slane %v1220, 6
    %v1231 = vperm.slane %v1220, 7
    %v1232 = vperm.slane %v1221, 0
    %v1233 = vperm.slane %v1221, 1
    %v1234 = vperm.slane %v1221, 2
    %v1235 = vperm.slane %v1221, 3
    %v1236 = vperm.slane %v1221, 4
    %v1237 = vperm.slane %v1221, 5
    %v1238 = vperm.slane %v1221, 6
    %v1239 = vperm.slane %v1221, 7
    %v1296 = vunpack.c.l.b16 %v1180
    %v1297 = vunpack.c.h.b16 %v1180
    %v1298 = vunpack.c.l.b16 %v1181
    %v1299 = vunpack.c.h.b16 %v1181
    %v1300 = vunpack.c.l.b16 %v1182
    %v1301 = vunpack.c.h.b16 %v1182
    %v1302 = vunpack.c.l.b16 %v1183
    %v1303 = vunpack.c.h.b16 %v1183
    %v1304 = vunpack.c.l.b16 %v1184
    %v1305 = vunpack.c.h.b16 %v1184
    %v1306 = vunpack.c.l.b16 %v1185
    %v1307 = vunpack.c.h.b16 %v1185
    %v1308 = vunpack.c.l.b16 %v1186
    %v1309 = vunpack.c.h.b16 %v1186
    %v1310 = vunpack.c.l.b16 %v1187
    %v1311 = vunpack.c.h.b16 %v1187
    %v1312 = vunpack.c.l.b16 %v1188
    %v1313 = vunpack.c.h.b16 %v1188
    %v1314 = vunpack.c.l.b16 %v1189
    %v1315 = vunpack.c.h.b16 %v1189
    %v1316 = vunpack.c.l.b16 %v1190
    %v1317 = vunpack.c.h.b16 %v1190
    %v1318 = vunpack.c.l.b16 %v1191
    %v1319 = vunpack.c.h.b16 %v1191
    %v1320 = vunpack.c.l.b16 %v1192
    %v1321 = vunpack.c.h.b16 %v1192
    %v1322 = vunpack.c.l.b16 %v1193
    %v1323 = vunpack.c.h.b16 %v1193
    %v1324 = vunpack.c.l.b16 %v1194
    %v1325 = vunpack.c.h.b16 %v1194
    %v1326 = vunpack.c.l.b16 %v1195
    %v1327 = vunpack.c.h.b16 %v1195
    %v1328 = vunpack.c.l.b16 %v1196
    %v1329 = vunpack.c.h.b16 %v1196
    %v1330 = vunpack.c.l.b16 %v1197
    %v1331 = vunpack.c.h.b16 %v1197
    %v1332 = vunpack.c.l.b16 %v1198
    %v1333 = vunpack.c.h.b16 %v1198
    %v1334 = vunpack.c.l.b16 %v1199
    %v1335 = vunpack.c.h.b16 %v1199
    %v1336 = vunpack.c.l.b16 %v1200
    %v1337 = vunpack.c.h.b16 %v1200
    %v1338 = vunpack.c.l.b16 %v1201
    %v1339 = vunpack.c.h.b16 %v1201
    %v1340 = vunpack.c.l.b16 %v1202
    %v1341 = vunpack.c.h.b16 %v1202
    %v1342 = vunpack.c.l.b16 %v1203
    %v1343 = vunpack.c.h.b16 %v1203
    %v1344 = vunpack.c.l.b16 %v1204
    %v1345 = vunpack.c.h.b16 %v1204
    %v1346 = vunpack.c.l.b16 %v1205
    %v1347 = vunpack.c.h.b16 %v1205
    %v1348 = vunpack.c.l.b16 %v1206
    %v1349 = vunpack.c.h.b16 %v1206
    %v1350 = vunpack.c.l.b16 %v1207
    %v1351 = vunpack.c.h.b16 %v1207
    %v1352 = vunpack.c.l.b16 %v1208
    %v1353 = vunpack.c.h.b16 %v1208
    %v1354 = vunpack.c.l.b16 %v1209
    %v1355 = vunpack.c.h.b16 %v1209
    %v1356 = vunpack.c.l.b16 %v1210
    %v1357 = vunpack.c.h.b16 %v1210
    %v1358 = vunpack.c.l.b16 %v1211
    %v1359 = vunpack.c.h.b16 %v1211
    %v1360 = vunpack.c.l.b16 %v1212
    %v1361 = vunpack.c.h.b16 %v1212
    %v1362 = vunpack.c.l.b16 %v1213
    %v1363 = vunpack.c.h.b16 %v1213
    %v1364 = vunpack.c.l.b16 %v1214
    %v1365 = vunpack.c.h.b16 %v1214
    %v1366 = vunpack.c.l.b16 %v1215
    %v1367 = vunpack.c.h.b16 %v1215
    %v1368 = vunpack.c.l.b16 %v1216
    %v1369 = vunpack.c.h.b16 %v1216
    %v1370 = vunpack.c.l.b16 %v1217
    %v1371 = vunpack.c.h.b16 %v1217
    %v1372 = vunpack.c.l.b16 %v1218
    %v1373 = vunpack.c.h.b16 %v1218
    %v1374 = vunpack.c.l.b16 %v1219
    %v1375 = vunpack.c.h.b16 %v1219
    %v1376 = vpack.c.b16 %v1312, %v1296
    %v1377 = vpack.c.b16 %v1313, %v1297
    %v1378 = vpack.c.b16 %v1314, %v1298
    %v1379 = vpack.c.b16 %v1315, %v1299
    %v1380 = vpack.c.b16 %v1316, %v1300
    %v1381 = vpack.c.b16 %v1317, %v1301
    %v1382 = vpack.c.b16 %v1318, %v1302
    %v1383 = vpack.c.b16 %v1319, %v1303
    %v1384 = vpack.c.b16 %v1320, %v1304
    %v1385 = vpack.c.b16 %v1321, %v1305
    %v1386 = vpack.c.b16 %v1322, %v1306
    %v1387 = vpack.c.b16 %v1323, %v1307
    %v1388 = vpack.c.b16 %v1324, %v1308
    %v1389 = vpack.c.b16 %v1325, %v1309
    %v1390 = vpack.c.b16 %v1326, %v1310
    %v1391 = vpack.c.b16 %v1327, %v1311
    %v1392 = vpack.c.b16 %v1344, %v1328
    %v1393 = vpack.c.b16 %v1345, %v1329
    %v1394 = vpack.c.b16 %v1346, %v1330
    %v1395 = vpack.c.b16 %v1347, %v1331
    %v1396 = vpack.c.b16 %v1348, %v1332
    %v1397 = vpack.c.b16 %v1349, %v1333
    %v1398 = vpack.c.b16 %v1350, %v1334
    %v1399 = vpack.c.b16 %v1351, %v1335
    %v1400 = vpack.c.b16 %v1352, %v1336
    %v1401 = vpack.c.b16 %v1353, %v1337
    %v1402 = vpack.c.b16 %v1354, %v1338
    %v1403 = vpack.c.b16 %v1355, %v1339
    %v1404 = vpack.c.b16 %v1356, %v1340
    %v1405 = vpack.c.b16 %v1357, %v1341
    %v1406 = vpack.c.b16 %v1358, %v1342
    %v1407 = vpack.c.b16 %v1359, %v1343
    %v1408 = vpack.c.b16 %v1360, %v1360
    %v1409 = vpack.c.b16 %v1361, %v1361
    %v1410 = vpack.c.b16 %v1362, %v1362
    %v1411 = vpack.c.b16 %v1363, %v1363
    %v1412 = vpack.c.b16 %v1364, %v1364
    %v1413 = vpack.c.b16 %v1365, %v1365
    %v1414 = vpack.c.b16 %v1366, %v1366
    %v1415 = vpack.c.b16 %v1367, %v1367
    %v1416 = vpack.c.b16 %v1368, %v1368
    %v1417 = vpack.c.b16 %v1369, %v1369
    %v1418 = vpack.c.b16 %v1370, %v1370
    %v1419 = vpack.c.b16 %v1371, %v1371
    %v1420 = vpack.c.b16 %v1372, %v1372
    %v1421 = vpack.c.b16 %v1373, %v1373
    %v1422 = vpack.c.b16 %v1374, %v1374
    %v1423 = vpack.c.b16 %v1375, %v1375
    %v1457 = vsel %vm145, %v1179, 0
    %vm1459 = vcmask 1043456
    %v1461 = vsel %vm1459, %v1408, 0
    %v1464 = vsel %vm1459, %v1409, 0
    %v1467 = vsel %vm1459, %v1410, 0
    %v1470 = vsel %vm1459, %v1411, 0
    %v1473 = vsel %vm1459, %v1412, 0
    %v1476 = vsel %vm1459, %v1413, 0
    %v1479 = vsel %vm1459, %v1414, 0
    %v1482 = vsel %vm1459, %v1415, 0
    %v1485 = vsel %vm1459, %v1416, 0
    %v1488 = vsel %vm1459, %v1417, 0
    %v1491 = vsel %vm1459, %v1418, 0
    %v1494 = vsel %vm1459, %v1419, 0
    %v1497 = vsel %vm1459, %v1420, 0
    %v1500 = vsel %vm1459, %v1421, 0
    %v1503 = vsel %vm1459, %v1422, 0
    %v1506 = vsel %vm1459, %v1423, 0
    %1508 = vmatpush.bf16.msra.mxu0 0
    %1509 = vmatpush.bf16.msra.mxu0 0
    %1510 = vmatpush.bf16.msra.mxu0 0
    %1511 = vmatpush.bf16.msra.mxu0 0
    %1512 = vmatpush.bf16.msra.mxu0 0
    %1513 = vmatpush.bf16.msra.mxu0 %v1461
    %1514 = vmatpush.bf16.msra.mxu0 %v1392
    %1515 = vmatpush.bf16.msra.mxu0 %v1376
    %1516 = vmatmul.bf16.gmra.mxu0 %v1457
    %v1517 = vpop.f32.mrf.mxu0
    %v1518 = vadd.f32 %v1224, %v1517
    %v1519 = vpop.f32.mrf.mxu0
    %v1520 = vadd.f32 %v1224, %v1519
    %1521 = vdwg.mxu0
    %1522 = vmatpush.bf16.msra.mxu0 0
    %1523 = vmatpush.bf16.msra.mxu0 0
    %1524 = vmatpush.bf16.msra.mxu0 0
    %1525 = vmatpush.bf16.msra.mxu0 0
    %1526 = vmatpush.bf16.msra.mxu0 0
    %1527 = vmatpush.bf16.msra.mxu0 %v1464
    %1528 = vmatpush.bf16.msra.mxu0 %v1393
    %1529 = vmatpush.bf16.msra.mxu0 %v1377
    %1530 = vmatmul.bf16.gmra.mxu0 %v1457
    %v1531 = vpop.f32.mrf.mxu0
    %v1532 = vadd.f32 %v1225, %v1531
    %v1533 = vpop.f32.mrf.mxu0
    %v1534 = vadd.f32 %v1225, %v1533
    %1535 = vdwg.mxu0
    %1536 = vmatpush.bf16.msra.mxu0 0
    %1537 = vmatpush.bf16.msra.mxu0 0
    %1538 = vmatpush.bf16.msra.mxu0 0
    %1539 = vmatpush.bf16.msra.mxu0 0
    %1540 = vmatpush.bf16.msra.mxu0 0
    %1541 = vmatpush.bf16.msra.mxu0 %v1467
    %1542 = vmatpush.bf16.msra.mxu0 %v1394
    %1543 = vmatpush.bf16.msra.mxu0 %v1378
    %1544 = vmatmul.bf16.gmra.mxu0 %v1457
    %v1545 = vpop.f32.mrf.mxu0
    %v1546 = vadd.f32 %v1226, %v1545
    %v1547 = vpop.f32.mrf.mxu0
    %v1548 = vadd.f32 %v1226, %v1547
    %1549 = vdwg.mxu0
    %1550 = vmatpush.bf16.msra.mxu0 0
    %1551 = vmatpush.bf16.msra.mxu0 0
    %1552 = vmatpush.bf16.msra.mxu0 0
    %1553 = vmatpush.bf16.msra.mxu0 0
    %1554 = vmatpush.bf16.msra.mxu0 0
    %1555 = vmatpush.bf16.msra.mxu0 %v1470
    %1556 = vmatpush.bf16.msra.mxu0 %v1395
    %1557 = vmatpush.bf16.msra.mxu0 %v1379
    %1558 = vmatmul.bf16.gmra.mxu0 %v1457
    %v1559 = vpop.f32.mrf.mxu0
    %v1560 = vadd.f32 %v1227, %v1559
    %v1561 = vpop.f32.mrf.mxu0
    %v1562 = vadd.f32 %v1227, %v1561
    %1563 = vdwg.mxu0
    %1564 = vmatpush.bf16.msra.mxu0 0
    %1565 = vmatpush.bf16.msra.mxu0 0
    %1566 = vmatpush.bf16.msra.mxu0 0
    %1567 = vmatpush.bf16.msra.mxu0 0
    %1568 = vmatpush.bf16.msra.mxu0 0
    %1569 = vmatpush.bf16.msra.mxu0 %v1473
    %1570 = vmatpush.bf16.msra.mxu0 %v1396
    %1571 = vmatpush.bf16.msra.mxu0 %v1380
    %1572 = vmatmul.bf16.gmra.mxu0 %v1457
    %v1573 = vpop.f32.mrf.mxu0
    %v1574 = vadd.f32 %v1228, %v1573
    %v1575 = vpop.f32.mrf.mxu0
    %v1576 = vadd.f32 %v1228, %v1575
    %1577 = vdwg.mxu0
    %1578 = vmatpush.bf16.msra.mxu0 0
    %1579 = vmatpush.bf16.msra.mxu0 0
    %1580 = vmatpush.bf16.msra.mxu0 0
    %1581 = vmatpush.bf16.msra.mxu0 0
    %1582 = vmatpush.bf16.msra.mxu0 0
    %1583 = vmatpush.bf16.msra.mxu0 %v1476
    %1584 = vmatpush.bf16.msra.mxu0 %v1397
    %1585 = vmatpush.bf16.msra.mxu0 %v1381
    %1586 = vmatmul.bf16.gmra.mxu0 %v1457
    %v1587 = vpop.f32.mrf.mxu0
    %v1588 = vadd.f32 %v1229, %v1587
    %v1589 = vpop.f32.mrf.mxu0
    %v1590 = vadd.f32 %v1229, %v1589
    %1591 = vdwg.mxu0
    %1592 = vmatpush.bf16.msra.mxu0 0
    %1593 = vmatpush.bf16.msra.mxu0 0
    %1594 = vmatpush.bf16.msra.mxu0 0
    %1595 = vmatpush.bf16.msra.mxu0 0
    %1596 = vmatpush.bf16.msra.mxu0 0
    %1597 = vmatpush.bf16.msra.mxu0 %v1479
    %1598 = vmatpush.bf16.msra.mxu0 %v1398
    %1599 = vmatpush.bf16.msra.mxu0 %v1382
    %1600 = vmatmul.bf16.gmra.mxu0 %v1457
    %v1601 = vpop.f32.mrf.mxu0
    %v1602 = vadd.f32 %v1230, %v1601
    %v1603 = vpop.f32.mrf.mxu0
    %v1604 = vadd.f32 %v1230, %v1603
    %1605 = vdwg.mxu0
    %1606 = vmatpush.bf16.msra.mxu0 0
    %1607 = vmatpush.bf16.msra.mxu0 0
    %1608 = vmatpush.bf16.msra.mxu0 0
    %1609 = vmatpush.bf16.msra.mxu0 0
    %1610 = vmatpush.bf16.msra.mxu0 0
    %1611 = vmatpush.bf16.msra.mxu0 %v1482
    %1612 = vmatpush.bf16.msra.mxu0 %v1399
    %1613 = vmatpush.bf16.msra.mxu0 %v1383
    %1614 = vmatmul.bf16.gmra.mxu0 %v1457
    %v1615 = vpop.f32.mrf.mxu0
    %v1616 = vadd.f32 %v1231, %v1615
    %v1617 = vpop.f32.mrf.mxu0
    %v1618 = vadd.f32 %v1231, %v1617
    %1619 = vdwg.mxu0
    %1620 = vmatpush.bf16.msra.mxu0 0
    %1621 = vmatpush.bf16.msra.mxu0 0
    %1622 = vmatpush.bf16.msra.mxu0 0
    %1623 = vmatpush.bf16.msra.mxu0 0
    %1624 = vmatpush.bf16.msra.mxu0 0
    %1625 = vmatpush.bf16.msra.mxu0 %v1485
    %1626 = vmatpush.bf16.msra.mxu0 %v1400
    %1627 = vmatpush.bf16.msra.mxu0 %v1384
    %1628 = vmatmul.bf16.gmra.mxu0 %v1457
    %v1629 = vpop.f32.mrf.mxu0
    %v1630 = vadd.f32 %v1232, %v1629
    %v1631 = vpop.f32.mrf.mxu0
    %v1632 = vadd.f32 %v1232, %v1631
    %1633 = vdwg.mxu0
    %1634 = vmatpush.bf16.msra.mxu0 0
    %1635 = vmatpush.bf16.msra.mxu0 0
    %1636 = vmatpush.bf16.msra.mxu0 0
    %1637 = vmatpush.bf16.msra.mxu0 0
    %1638 = vmatpush.bf16.msra.mxu0 0
    %1639 = vmatpush.bf16.msra.mxu0 %v1488
    %1640 = vmatpush.bf16.msra.mxu0 %v1401
    %1641 = vmatpush.bf16.msra.mxu0 %v1385
    %1642 = vmatmul.bf16.gmra.mxu0 %v1457
    %v1643 = vpop.f32.mrf.mxu0
    %v1644 = vadd.f32 %v1233, %v1643
    %v1645 = vpop.f32.mrf.mxu0
    %v1646 = vadd.f32 %v1233, %v1645
    %1647 = vdwg.mxu0
    %1648 = vmatpush.bf16.msra.mxu0 0
    %1649 = vmatpush.bf16.msra.mxu0 0
    %1650 = vmatpush.bf16.msra.mxu0 0
    %1651 = vmatpush.bf16.msra.mxu0 0
    %1652 = vmatpush.bf16.msra.mxu0 0
    %1653 = vmatpush.bf16.msra.mxu0 %v1491
    %1654 = vmatpush.bf16.msra.mxu0 %v1402
    %1655 = vmatpush.bf16.msra.mxu0 %v1386
    %1656 = vmatmul.bf16.gmra.mxu0 %v1457
    %v1657 = vpop.f32.mrf.mxu0
    %v1658 = vadd.f32 %v1234, %v1657
    %v1659 = vpop.f32.mrf.mxu0
    %v1660 = vadd.f32 %v1234, %v1659
    %1661 = vdwg.mxu0
    %1662 = vmatpush.bf16.msra.mxu0 0
    %1663 = vmatpush.bf16.msra.mxu0 0
    %1664 = vmatpush.bf16.msra.mxu0 0
    %1665 = vmatpush.bf16.msra.mxu0 0
    %1666 = vmatpush.bf16.msra.mxu0 0
    %1667 = vmatpush.bf16.msra.mxu0 %v1494
    %1668 = vmatpush.bf16.msra.mxu0 %v1403
    %1669 = vmatpush.bf16.msra.mxu0 %v1387
    %1670 = vmatmul.bf16.gmra.mxu0 %v1457
    %v1671 = vpop.f32.mrf.mxu0
    %v1672 = vadd.f32 %v1235, %v1671
    %v1673 = vpop.f32.mrf.mxu0
    %v1674 = vadd.f32 %v1235, %v1673
    %1675 = vdwg.mxu0
    %1676 = vmatpush.bf16.msra.mxu0 0
    %1677 = vmatpush.bf16.msra.mxu0 0
    %1678 = vmatpush.bf16.msra.mxu0 0
    %1679 = vmatpush.bf16.msra.mxu0 0
    %1680 = vmatpush.bf16.msra.mxu0 0
    %1681 = vmatpush.bf16.msra.mxu0 %v1497
    %1682 = vmatpush.bf16.msra.mxu0 %v1404
    %1683 = vmatpush.bf16.msra.mxu0 %v1388
    %1684 = vmatmul.bf16.gmra.mxu0 %v1457
    %v1685 = vpop.f32.mrf.mxu0
    %v1686 = vadd.f32 %v1236, %v1685
    %v1687 = vpop.f32.mrf.mxu0
    %v1688 = vadd.f32 %v1236, %v1687
    %1689 = vdwg.mxu0
    %1690 = vmatpush.bf16.msra.mxu0 0
    %1691 = vmatpush.bf16.msra.mxu0 0
    %1692 = vmatpush.bf16.msra.mxu0 0
    %1693 = vmatpush.bf16.msra.mxu0 0
    %1694 = vmatpush.bf16.msra.mxu0 0
    %1695 = vmatpush.bf16.msra.mxu0 %v1500
    %1696 = vmatpush.bf16.msra.mxu0 %v1405
    %1697 = vmatpush.bf16.msra.mxu0 %v1389
    %1698 = vmatmul.bf16.gmra.mxu0 %v1457
    %v1699 = vpop.f32.mrf.mxu0
    %v1700 = vadd.f32 %v1237, %v1699
    %v1701 = vpop.f32.mrf.mxu0
    %v1702 = vadd.f32 %v1237, %v1701
    %1703 = vdwg.mxu0
    %1704 = vmatpush.bf16.msra.mxu0 0
    %1705 = vmatpush.bf16.msra.mxu0 0
    %1706 = vmatpush.bf16.msra.mxu0 0
    %1707 = vmatpush.bf16.msra.mxu0 0
    %1708 = vmatpush.bf16.msra.mxu0 0
    %1709 = vmatpush.bf16.msra.mxu0 %v1503
    %1710 = vmatpush.bf16.msra.mxu0 %v1406
    %1711 = vmatpush.bf16.msra.mxu0 %v1390
    %1712 = vmatmul.bf16.gmra.mxu0 %v1457
    %v1713 = vpop.f32.mrf.mxu0
    %v1714 = vadd.f32 %v1238, %v1713
    %v1715 = vpop.f32.mrf.mxu0
    %v1716 = vadd.f32 %v1238, %v1715
    %1717 = vdwg.mxu0
    %1718 = vmatpush.bf16.msra.mxu0 0
    %1719 = vmatpush.bf16.msra.mxu0 0
    %1720 = vmatpush.bf16.msra.mxu0 0
    %1721 = vmatpush.bf16.msra.mxu0 0
    %1722 = vmatpush.bf16.msra.mxu0 0
    %1723 = vmatpush.bf16.msra.mxu0 %v1506
    %1724 = vmatpush.bf16.msra.mxu0 %v1407
    %1725 = vmatpush.bf16.msra.mxu0 %v1391
    %1726 = vmatmul.bf16.gmra.mxu0 %v1457
    %v1727 = vpop.f32.mrf.mxu0
    %v1728 = vadd.f32 %v1239, %v1727
    %v1729 = vpop.f32.mrf.mxu0
    %v1730 = vadd.f32 %v1239, %v1729
    %1731 = vdwg.mxu0
    %v1732 = vmax.f32 %v1518, 0.0
    %v1733 = vmax.f32 %v1532, 0.0
    %v1734 = vmax.f32 %v1546, 0.0
    %v1735 = vmax.f32 %v1560, 0.0
    %v1736 = vmax.f32 %v1574, 0.0
    %v1737 = vmax.f32 %v1588, 0.0
    %v1738 = vmax.f32 %v1602, 0.0
    %v1739 = vmax.f32 %v1616, 0.0
    %v1740 = vmax.f32 %v1630, 0.0
    %v1741 = vmax.f32 %v1644, 0.0
    %v1742 = vmax.f32 %v1658, 0.0
    %v1743 = vmax.f32 %v1672, 0.0
    %v1744 = vmax.f32 %v1686, 0.0
    %v1745 = vmax.f32 %v1700, 0.0
    %v1746 = vmax.f32 %v1714, 0.0
    %v1747 = vmax.f32 %v1728, 0.0
    %v1748 = vmax.f32 %v1520, 0.0
    %v1749 = vmax.f32 %v1534, 0.0
    %v1750 = vmax.f32 %v1548, 0.0
    %v1751 = vmax.f32 %v1562, 0.0
    %v1752 = vmax.f32 %v1576, 0.0
    %v1753 = vmax.f32 %v1590, 0.0
    %v1754 = vmax.f32 %v1604, 0.0
    %v1755 = vmax.f32 %v1618, 0.0
    %v1756 = vmax.f32 %v1632, 0.0
    %v1757 = vmax.f32 %v1646, 0.0
    %v1758 = vmax.f32 %v1660, 0.0
    %v1759 = vmax.f32 %v1674, 0.0
    %v1760 = vmax.f32 %v1688, 0.0
    %v1761 = vmax.f32 %v1702, 0.0
    %v1762 = vmax.f32 %v1716, 0.0
    %v1763 = vmax.f32 %v1730, 0.0
    %s1764 = sshll.u32 %s1176, 4
    %1765 = dma.done %s94, %s1764
    %v1766 = vpack.c.bf16 %v1748, %v1732
    %v1767 = vpack.c.bf16 %v1749, %v1733
    %v1768 = vpack.c.bf16 %v1750, %v1734
    %v1769 = vpack.c.bf16 %v1751, %v1735
    %v1770 = vpack.c.bf16 %v1752, %v1736
    %v1771 = vpack.c.bf16 %v1753, %v1737
    %v1772 = vpack.c.bf16 %v1754, %v1738
    %v1773 = vpack.c.bf16 %v1755, %v1739
    %v1774 = vpack.c.bf16 %v1756, %v1740
    %v1775 = vpack.c.bf16 %v1757, %v1741
    %v1776 = vpack.c.bf16 %v1758, %v1742
    %v1777 = vpack.c.bf16 %v1759, %v1743
    %v1778 = vpack.c.bf16 %v1760, %v1744
    %v1779 = vpack.c.bf16 %v1761, %v1745
    %v1780 = vpack.c.bf16 %v1762, %v1746
    %v1781 = vpack.c.bf16 %v1763, %v1747
    %v1782 = vld [vmem:[#allocation3] sm:$0xff]
    %v1783 = vld [vmem:[#allocation3 + $0x8] sm:$0xff]
    %v1784 = vld [vmem:[#allocation3 + $0x10] sm:$0xff]
    %v1785 = vld [vmem:[#allocation3 + $0x18] sm:$0xff]
    %v1786 = vld [vmem:[#allocation3 + $0x20] sm:$0xff]
    %v1787 = vld [vmem:[#allocation3 + $0x28] sm:$0xff]
    %v1788 = vld [vmem:[#allocation3 + $0x30] sm:$0xff]
    %v1789 = vld [vmem:[#allocation3 + $0x38] sm:$0xff]
    %v1790 = vld [vmem:[#allocation3 + $0x40] sm:$0xff]
    %v1791 = vld [vmem:[#allocation3 + $0x48] sm:$0xff]
    %v1792 = vld [vmem:[#allocation3 + $0x50] sm:$0xff]
    %v1793 = vld [vmem:[#allocation3 + $0x58] sm:$0xff]
    %v1794 = vld [vmem:[#allocation3 + $0x60] sm:$0xff]
    %v1795 = vld [vmem:[#allocation3 + $0x68] sm:$0xff]
    %v1796 = vld [vmem:[#allocation3 + $0x70] sm:$0xff]
    %v1797 = vld [vmem:[#allocation3 + $0x78] sm:$0xff]
    %v1798 = vld [vmem:[#allocation3 + $0x80] sm:$0xff]
    %v1799 = vld [vmem:[#allocation3 + $0x88] sm:$0xff]
    %v1800 = vld [vmem:[#allocation3 + $0x90] sm:$0xff]
    %v1801 = vld [vmem:[#allocation3 + $0x98] sm:$0xff]
    %v1802 = vld [vmem:[#allocation3 + $0xa0] sm:$0xff]
    %v1803 = vld [vmem:[#allocation3 + $0xa8] sm:$0xff]
    %v1804 = vld [vmem:[#allocation3 + $0xb0] sm:$0xff]
    %v1805 = vld [vmem:[#allocation3 + $0xb8] sm:$0xff]
    %v1806 = vld [vmem:[#allocation3 + $0xc0] sm:$0xff]
    %v1807 = vld [vmem:[#allocation3 + $0xc8] sm:$0xff]
    %v1808 = vld [vmem:[#allocation3 + $0xd0] sm:$0xff]
    %v1809 = vld [vmem:[#allocation3 + $0xd8] sm:$0xff]
    %v1810 = vld [vmem:[#allocation3 + $0xe0] sm:$0xff]
    %v1811 = vld [vmem:[#allocation3 + $0xe8] sm:$0xff]
    %v1812 = vld [vmem:[#allocation3 + $0xf0] sm:$0xff]
    %v1813 = vld [vmem:[#allocation3 + $0xf8] sm:$0xff]
    %v1814 = vld [vmem:[#allocation3 + $0x100] sm:$0xff]
    %v1815 = vld [vmem:[#allocation3 + $0x108] sm:$0xff]
    %v1816 = vld [vmem:[#allocation3 + $0x110] sm:$0xff]
    %v1817 = vld [vmem:[#allocation3 + $0x118] sm:$0xff]
    %v1818 = vld [vmem:[#allocation3 + $0x120] sm:$0xff]
    %v1819 = vld [vmem:[#allocation3 + $0x128] sm:$0xff]
    %v1820 = vld [vmem:[#allocation3 + $0x130] sm:$0xff]
    %v1821 = vld [vmem:[#allocation3 + $0x138] sm:$0xff]
    %v1822 = vld [vmem:[#allocation7 + $0x24] sm:$0x1]
    %v1823 = vperm.slane %v1822, 0
    %v1864 = vunpack.c.l.b16 %v1782
    %v1865 = vunpack.c.h.b16 %v1782
    %v1866 = vunpack.c.l.b16 %v1783
    %v1867 = vunpack.c.h.b16 %v1783
    %v1868 = vunpack.c.l.b16 %v1784
    %v1869 = vunpack.c.h.b16 %v1784
    %v1870 = vunpack.c.l.b16 %v1785
    %v1871 = vunpack.c.h.b16 %v1785
    %v1872 = vunpack.c.l.b16 %v1786
    %v1873 = vunpack.c.h.b16 %v1786
    %v1874 = vunpack.c.l.b16 %v1787
    %v1875 = vunpack.c.h.b16 %v1787
    %v1876 = vunpack.c.l.b16 %v1788
    %v1877 = vunpack.c.h.b16 %v1788
    %v1878 = vunpack.c.l.b16 %v1789
    %v1879 = vunpack.c.h.b16 %v1789
    %v1880 = vunpack.c.l.b16 %v1790
    %v1881 = vunpack.c.h.b16 %v1790
    %v1882 = vunpack.c.l.b16 %v1791
    %v1883 = vunpack.c.h.b16 %v1791
    %v1884 = vunpack.c.l.b16 %v1792
    %v1885 = vunpack.c.h.b16 %v1792
    %v1886 = vunpack.c.l.b16 %v1793
    %v1887 = vunpack.c.h.b16 %v1793
    %v1888 = vunpack.c.l.b16 %v1794
    %v1889 = vunpack.c.h.b16 %v1794
    %v1890 = vunpack.c.l.b16 %v1795
    %v1891 = vunpack.c.h.b16 %v1795
    %v1892 = vunpack.c.l.b16 %v1796
    %v1893 = vunpack.c.h.b16 %v1796
    %v1894 = vunpack.c.l.b16 %v1797
    %v1895 = vunpack.c.h.b16 %v1797
    %v1896 = vunpack.c.l.b16 %v1798
    %v1897 = vunpack.c.h.b16 %v1798
    %v1898 = vunpack.c.l.b16 %v1799
    %v1899 = vunpack.c.h.b16 %v1799
    %v1900 = vunpack.c.l.b16 %v1800
    %v1901 = vunpack.c.h.b16 %v1800
    %v1902 = vunpack.c.l.b16 %v1801
    %v1903 = vunpack.c.h.b16 %v1801
    %v1904 = vunpack.c.l.b16 %v1802
    %v1905 = vunpack.c.h.b16 %v1802
    %v1906 = vunpack.c.l.b16 %v1803
    %v1907 = vunpack.c.h.b16 %v1803
    %v1908 = vunpack.c.l.b16 %v1804
    %v1909 = vunpack.c.h.b16 %v1804
    %v1910 = vunpack.c.l.b16 %v1805
    %v1911 = vunpack.c.h.b16 %v1805
    %v1912 = vunpack.c.l.b16 %v1806
    %v1913 = vunpack.c.h.b16 %v1806
    %v1914 = vunpack.c.l.b16 %v1807
    %v1915 = vunpack.c.h.b16 %v1807
    %v1916 = vunpack.c.l.b16 %v1808
    %v1917 = vunpack.c.h.b16 %v1808
    %v1918 = vunpack.c.l.b16 %v1809
    %v1919 = vunpack.c.h.b16 %v1809
    %v1920 = vunpack.c.l.b16 %v1810
    %v1921 = vunpack.c.h.b16 %v1810
    %v1922 = vunpack.c.l.b16 %v1811
    %v1923 = vunpack.c.h.b16 %v1811
    %v1924 = vunpack.c.l.b16 %v1812
    %v1925 = vunpack.c.h.b16 %v1812
    %v1926 = vunpack.c.l.b16 %v1813
    %v1927 = vunpack.c.h.b16 %v1813
    %v1928 = vunpack.c.l.b16 %v1814
    %v1929 = vunpack.c.h.b16 %v1814
    %v1930 = vunpack.c.l.b16 %v1815
    %v1931 = vunpack.c.h.b16 %v1815
    %v1932 = vunpack.c.l.b16 %v1816
    %v1933 = vunpack.c.h.b16 %v1816
    %v1934 = vunpack.c.l.b16 %v1817
    %v1935 = vunpack.c.h.b16 %v1817
    %v1936 = vunpack.c.l.b16 %v1818
    %v1937 = vunpack.c.h.b16 %v1818
    %v1938 = vunpack.c.l.b16 %v1819
    %v1939 = vunpack.c.h.b16 %v1819
    %v1940 = vunpack.c.l.b16 %v1820
    %v1941 = vunpack.c.h.b16 %v1820
    %v1942 = vunpack.c.l.b16 %v1821
    %v1943 = vunpack.c.h.b16 %v1821
    %v1944 = vpack.c.b16 %v1880, %v1864
    %v1945 = vpack.c.b16 %v1881, %v1865
    %v1946 = vpack.c.b16 %v1882, %v1866
    %v1947 = vpack.c.b16 %v1883, %v1867
    %v1948 = vpack.c.b16 %v1884, %v1868
    %v1949 = vpack.c.b16 %v1885, %v1869
    %v1950 = vpack.c.b16 %v1886, %v1870
    %v1951 = vpack.c.b16 %v1887, %v1871
    %v1952 = vpack.c.b16 %v1888, %v1872
    %v1953 = vpack.c.b16 %v1889, %v1873
    %v1954 = vpack.c.b16 %v1890, %v1874
    %v1955 = vpack.c.b16 %v1891, %v1875
    %v1956 = vpack.c.b16 %v1892, %v1876
    %v1957 = vpack.c.b16 %v1893, %v1877
    %v1958 = vpack.c.b16 %v1894, %v1878
    %v1959 = vpack.c.b16 %v1895, %v1879
    %v1960 = vpack.c.b16 %v1912, %v1896
    %v1961 = vpack.c.b16 %v1913, %v1897
    %v1962 = vpack.c.b16 %v1914, %v1898
    %v1963 = vpack.c.b16 %v1915, %v1899
    %v1964 = vpack.c.b16 %v1916, %v1900
    %v1965 = vpack.c.b16 %v1917, %v1901
    %v1966 = vpack.c.b16 %v1918, %v1902
    %v1967 = vpack.c.b16 %v1919, %v1903
    %v1968 = vpack.c.b16 %v1920, %v1904
    %v1969 = vpack.c.b16 %v1921, %v1905
    %v1970 = vpack.c.b16 %v1922, %v1906
    %v1971 = vpack.c.b16 %v1923, %v1907
    %v1972 = vpack.c.b16 %v1924, %v1908
    %v1973 = vpack.c.b16 %v1925, %v1909
    %v1974 = vpack.c.b16 %v1926, %v1910
    %v1975 = vpack.c.b16 %v1927, %v1911
    %v1976 = vpack.c.b16 %v1928, %v1928
    %v1977 = vpack.c.b16 %v1929, %v1929
    %v1978 = vpack.c.b16 %v1930, %v1930
    %v1979 = vpack.c.b16 %v1931, %v1931
    %v1980 = vpack.c.b16 %v1932, %v1932
    %v1981 = vpack.c.b16 %v1933, %v1933
    %v1982 = vpack.c.b16 %v1934, %v1934
    %v1983 = vpack.c.b16 %v1935, %v1935
    %v1984 = vpack.c.b16 %v1936, %v1936
    %v1985 = vpack.c.b16 %v1937, %v1937
    %v1986 = vpack.c.b16 %v1938, %v1938
    %v1987 = vpack.c.b16 %v1939, %v1939
    %v1988 = vpack.c.b16 %v1940, %v1940
    %v1989 = vpack.c.b16 %v1941, %v1941
    %v1990 = vpack.c.b16 %v1942, %v1942
    %v1991 = vpack.c.b16 %v1943, %v1943
    %2040 = vmatpush.bf16.xpose.msra.mxu0 0
    %2041 = vmatpush.bf16.xpose.msra.mxu0 0
    %2042 = vmatpush.bf16.xpose.msra.mxu0 0
    %2043 = vmatpush.bf16.xpose.msra.mxu0 0
    %2044 = vmatpush.bf16.xpose.msra.mxu0 0
    %2045 = vmatpush.bf16.xpose.msra.mxu0 %v1976
    %2046 = vmatpush.bf16.xpose.msra.mxu0 %v1960
    %2047 = vmatpush.bf16.xpose.msra.mxu0 %v1944
    %2048 = vmatmul.bf16.gmra.mxu0 %v1766
    %v2049 = vpop.f32.mrf.mxu0
    %v2050 = vadd.f32 %v1823, %v2049
    %v2051 = vpop.f32.mrf.mxu0
    %v2052 = vadd.f32 %v1823, %v2051
    %2053 = vdwg.mxu0
    %2054 = vmatpush.bf16.xpose.msra.mxu0 0
    %2055 = vmatpush.bf16.xpose.msra.mxu0 0
    %2056 = vmatpush.bf16.xpose.msra.mxu0 0
    %2057 = vmatpush.bf16.xpose.msra.mxu0 0
    %2058 = vmatpush.bf16.xpose.msra.mxu0 0
    %2059 = vmatpush.bf16.xpose.msra.mxu0 %v1977
    %2060 = vmatpush.bf16.xpose.msra.mxu0 %v1961
    %2061 = vmatpush.bf16.xpose.msra.mxu0 %v1945
    %2062 = vmatmul.bf16.gmra.mxu0 %v1767
    %v2063 = vpop.f32.mrf.mxu0
    %v2064 = vadd.f32 %v2050, %v2063
    %v2065 = vpop.f32.mrf.mxu0
    %v2066 = vadd.f32 %v2052, %v2065
    %2067 = vdwg.mxu0
    %2068 = vmatpush.bf16.xpose.msra.mxu0 0
    %2069 = vmatpush.bf16.xpose.msra.mxu0 0
    %2070 = vmatpush.bf16.xpose.msra.mxu0 0
    %2071 = vmatpush.bf16.xpose.msra.mxu0 0
    %2072 = vmatpush.bf16.xpose.msra.mxu0 0
    %2073 = vmatpush.bf16.xpose.msra.mxu0 %v1978
    %2074 = vmatpush.bf16.xpose.msra.mxu0 %v1962
    %2075 = vmatpush.bf16.xpose.msra.mxu0 %v1946
    %2076 = vmatmul.bf16.gmra.mxu0 %v1768
    %v2077 = vpop.f32.mrf.mxu0
    %v2078 = vadd.f32 %v2064, %v2077
    %v2079 = vpop.f32.mrf.mxu0
    %v2080 = vadd.f32 %v2066, %v2079
    %2081 = vdwg.mxu0
    %2082 = vmatpush.bf16.xpose.msra.mxu0 0
    %2083 = vmatpush.bf16.xpose.msra.mxu0 0
    %2084 = vmatpush.bf16.xpose.msra.mxu0 0
    %2085 = vmatpush.bf16.xpose.msra.mxu0 0
    %2086 = vmatpush.bf16.xpose.msra.mxu0 0
    %2087 = vmatpush.bf16.xpose.msra.mxu0 %v1979
    %2088 = vmatpush.bf16.xpose.msra.mxu0 %v1963
    %2089 = vmatpush.bf16.xpose.msra.mxu0 %v1947
    %2090 = vmatmul.bf16.gmra.mxu0 %v1769
    %v2091 = vpop.f32.mrf.mxu0
    %v2092 = vadd.f32 %v2078, %v2091
    %v2093 = vpop.f32.mrf.mxu0
    %v2094 = vadd.f32 %v2080, %v2093
    %2095 = vdwg.mxu0
    %2096 = vmatpush.bf16.xpose.msra.mxu0 0
    %2097 = vmatpush.bf16.xpose.msra.mxu0 0
    %2098 = vmatpush.bf16.xpose.msra.mxu0 0
    %2099 = vmatpush.bf16.xpose.msra.mxu0 0
    %2100 = vmatpush.bf16.xpose.msra.mxu0 0
    %2101 = vmatpush.bf16.xpose.msra.mxu0 %v1980
    %2102 = vmatpush.bf16.xpose.msra.mxu0 %v1964
    %2103 = vmatpush.bf16.xpose.msra.mxu0 %v1948
    %2104 = vmatmul.bf16.gmra.mxu0 %v1770
    %v2105 = vpop.f32.mrf.mxu0
    %v2106 = vadd.f32 %v2092, %v2105
    %v2107 = vpop.f32.mrf.mxu0
    %v2108 = vadd.f32 %v2094, %v2107
    %2109 = vdwg.mxu0
    %2110 = vmatpush.bf16.xpose.msra.mxu0 0
    %2111 = vmatpush.bf16.xpose.msra.mxu0 0
    %2112 = vmatpush.bf16.xpose.msra.mxu0 0
    %2113 = vmatpush.bf16.xpose.msra.mxu0 0
    %2114 = vmatpush.bf16.xpose.msra.mxu0 0
    %2115 = vmatpush.bf16.xpose.msra.mxu0 %v1981
    %2116 = vmatpush.bf16.xpose.msra.mxu0 %v1965
    %2117 = vmatpush.bf16.xpose.msra.mxu0 %v1949
    %2118 = vmatmul.bf16.gmra.mxu0 %v1771
    %v2119 = vpop.f32.mrf.mxu0
    %v2120 = vadd.f32 %v2106, %v2119
    %v2121 = vpop.f32.mrf.mxu0
    %v2122 = vadd.f32 %v2108, %v2121
    %2123 = vdwg.mxu0
    %2124 = vmatpush.bf16.xpose.msra.mxu0 0
    %2125 = vmatpush.bf16.xpose.msra.mxu0 0
    %2126 = vmatpush.bf16.xpose.msra.mxu0 0
    %2127 = vmatpush.bf16.xpose.msra.mxu0 0
    %2128 = vmatpush.bf16.xpose.msra.mxu0 0
    %2129 = vmatpush.bf16.xpose.msra.mxu0 %v1982
    %2130 = vmatpush.bf16.xpose.msra.mxu0 %v1966
    %2131 = vmatpush.bf16.xpose.msra.mxu0 %v1950
    %2132 = vmatmul.bf16.gmra.mxu0 %v1772
    %v2133 = vpop.f32.mrf.mxu0
    %v2134 = vadd.f32 %v2120, %v2133
    %v2135 = vpop.f32.mrf.mxu0
    %v2136 = vadd.f32 %v2122, %v2135
    %2137 = vdwg.mxu0
    %2138 = vmatpush.bf16.xpose.msra.mxu0 0
    %2139 = vmatpush.bf16.xpose.msra.mxu0 0
    %2140 = vmatpush.bf16.xpose.msra.mxu0 0
    %2141 = vmatpush.bf16.xpose.msra.mxu0 0
    %2142 = vmatpush.bf16.xpose.msra.mxu0 0
    %2143 = vmatpush.bf16.xpose.msra.mxu0 %v1983
    %2144 = vmatpush.bf16.xpose.msra.mxu0 %v1967
    %2145 = vmatpush.bf16.xpose.msra.mxu0 %v1951
    %2146 = vmatmul.bf16.gmra.mxu0 %v1773
    %v2147 = vpop.f32.mrf.mxu0
    %v2148 = vadd.f32 %v2134, %v2147
    %v2149 = vpop.f32.mrf.mxu0
    %v2150 = vadd.f32 %v2136, %v2149
    %2151 = vdwg.mxu0
    %2152 = vmatpush.bf16.xpose.msra.mxu0 0
    %2153 = vmatpush.bf16.xpose.msra.mxu0 0
    %2154 = vmatpush.bf16.xpose.msra.mxu0 0
    %2155 = vmatpush.bf16.xpose.msra.mxu0 0
    %2156 = vmatpush.bf16.xpose.msra.mxu0 0
    %2157 = vmatpush.bf16.xpose.msra.mxu0 %v1984
    %2158 = vmatpush.bf16.xpose.msra.mxu0 %v1968
    %2159 = vmatpush.bf16.xpose.msra.mxu0 %v1952
    %2160 = vmatmul.bf16.gmra.mxu0 %v1774
    %v2161 = vpop.f32.mrf.mxu0
    %v2162 = vadd.f32 %v2148, %v2161
    %v2163 = vpop.f32.mrf.mxu0
    %v2164 = vadd.f32 %v2150, %v2163
    %2165 = vdwg.mxu0
    %2166 = vmatpush.bf16.xpose.msra.mxu0 0
    %2167 = vmatpush.bf16.xpose.msra.mxu0 0
    %2168 = vmatpush.bf16.xpose.msra.mxu0 0
    %2169 = vmatpush.bf16.xpose.msra.mxu0 0
    %2170 = vmatpush.bf16.xpose.msra.mxu0 0
    %2171 = vmatpush.bf16.xpose.msra.mxu0 %v1985
    %2172 = vmatpush.bf16.xpose.msra.mxu0 %v1969
    %2173 = vmatpush.bf16.xpose.msra.mxu0 %v1953
    %2174 = vmatmul.bf16.gmra.mxu0 %v1775
    %v2175 = vpop.f32.mrf.mxu0
    %v2176 = vadd.f32 %v2162, %v2175
    %v2177 = vpop.f32.mrf.mxu0
    %v2178 = vadd.f32 %v2164, %v2177
    %2179 = vdwg.mxu0
    %2180 = vmatpush.bf16.xpose.msra.mxu0 0
    %2181 = vmatpush.bf16.xpose.msra.mxu0 0
    %2182 = vmatpush.bf16.xpose.msra.mxu0 0
    %2183 = vmatpush.bf16.xpose.msra.mxu0 0
    %2184 = vmatpush.bf16.xpose.msra.mxu0 0
    %2185 = vmatpush.bf16.xpose.msra.mxu0 %v1986
    %2186 = vmatpush.bf16.xpose.msra.mxu0 %v1970
    %2187 = vmatpush.bf16.xpose.msra.mxu0 %v1954
    %2188 = vmatmul.bf16.gmra.mxu0 %v1776
    %v2189 = vpop.f32.mrf.mxu0
    %v2190 = vadd.f32 %v2176, %v2189
    %v2191 = vpop.f32.mrf.mxu0
    %v2192 = vadd.f32 %v2178, %v2191
    %2193 = vdwg.mxu0
    %2194 = vmatpush.bf16.xpose.msra.mxu0 0
    %2195 = vmatpush.bf16.xpose.msra.mxu0 0
    %2196 = vmatpush.bf16.xpose.msra.mxu0 0
    %2197 = vmatpush.bf16.xpose.msra.mxu0 0
    %2198 = vmatpush.bf16.xpose.msra.mxu0 0
    %2199 = vmatpush.bf16.xpose.msra.mxu0 %v1987
    %2200 = vmatpush.bf16.xpose.msra.mxu0 %v1971
    %2201 = vmatpush.bf16.xpose.msra.mxu0 %v1955
    %2202 = vmatmul.bf16.gmra.mxu0 %v1777
    %v2203 = vpop.f32.mrf.mxu0
    %v2204 = vadd.f32 %v2190, %v2203
    %v2205 = vpop.f32.mrf.mxu0
    %v2206 = vadd.f32 %v2192, %v2205
    %2207 = vdwg.mxu0
    %2208 = vmatpush.bf16.xpose.msra.mxu0 0
    %2209 = vmatpush.bf16.xpose.msra.mxu0 0
    %2210 = vmatpush.bf16.xpose.msra.mxu0 0
    %2211 = vmatpush.bf16.xpose.msra.mxu0 0
    %2212 = vmatpush.bf16.xpose.msra.mxu0 0
    %2213 = vmatpush.bf16.xpose.msra.mxu0 %v1988
    %2214 = vmatpush.bf16.xpose.msra.mxu0 %v1972
    %2215 = vmatpush.bf16.xpose.msra.mxu0 %v1956
    %2216 = vmatmul.bf16.gmra.mxu0 %v1778
    %v2217 = vpop.f32.mrf.mxu0
    %v2218 = vadd.f32 %v2204, %v2217
    %v2219 = vpop.f32.mrf.mxu0
    %v2220 = vadd.f32 %v2206, %v2219
    %2221 = vdwg.mxu0
    %2222 = vmatpush.bf16.xpose.msra.mxu0 0
    %2223 = vmatpush.bf16.xpose.msra.mxu0 0
    %2224 = vmatpush.bf16.xpose.msra.mxu0 0
    %2225 = vmatpush.bf16.xpose.msra.mxu0 0
    %2226 = vmatpush.bf16.xpose.msra.mxu0 0
    %2227 = vmatpush.bf16.xpose.msra.mxu0 %v1989
    %2228 = vmatpush.bf16.xpose.msra.mxu0 %v1973
    %2229 = vmatpush.bf16.xpose.msra.mxu0 %v1957
    %2230 = vmatmul.bf16.gmra.mxu0 %v1779
    %v2231 = vpop.f32.mrf.mxu0
    %v2232 = vadd.f32 %v2218, %v2231
    %v2233 = vpop.f32.mrf.mxu0
    %v2234 = vadd.f32 %v2220, %v2233
    %2235 = vdwg.mxu0
    %2236 = vmatpush.bf16.xpose.msra.mxu0 0
    %2237 = vmatpush.bf16.xpose.msra.mxu0 0
    %2238 = vmatpush.bf16.xpose.msra.mxu0 0
    %2239 = vmatpush.bf16.xpose.msra.mxu0 0
    %2240 = vmatpush.bf16.xpose.msra.mxu0 0
    %2241 = vmatpush.bf16.xpose.msra.mxu0 %v1990
    %2242 = vmatpush.bf16.xpose.msra.mxu0 %v1974
    %2243 = vmatpush.bf16.xpose.msra.mxu0 %v1958
    %2244 = vmatmul.bf16.gmra.mxu0 %v1780
    %v2245 = vpop.f32.mrf.mxu0
    %v2246 = vadd.f32 %v2232, %v2245
    %v2247 = vpop.f32.mrf.mxu0
    %v2248 = vadd.f32 %v2234, %v2247
    %2249 = vdwg.mxu0
    %2250 = vmatpush.bf16.xpose.msra.mxu0 0
    %2251 = vmatpush.bf16.xpose.msra.mxu0 0
    %2252 = vmatpush.bf16.xpose.msra.mxu0 0
    %2253 = vmatpush.bf16.xpose.msra.mxu0 0
    %2254 = vmatpush.bf16.xpose.msra.mxu0 0
    %2255 = vmatpush.bf16.xpose.msra.mxu0 %v1991
    %2256 = vmatpush.bf16.xpose.msra.mxu0 %v1975
    %2257 = vmatpush.bf16.xpose.msra.mxu0 %v1959
    %2258 = vmatmul.bf16.gmra.mxu0 %v1781
    %v2259 = vpop.f32.mrf.mxu0
    %v2260 = vadd.f32 %v2246, %v2259
    %v2261 = vpop.f32.mrf.mxu0
    %v2262 = vadd.f32 %v2248, %v2261
    %2263 = vdwg.mxu0
    %v2264 = vadd.f32 %v1173, %v2260
    %v2265 = vadd.f32 %v1174, %v2262
    %v2266 = vld [vmem:[#allocation7 + $0x22] sm:$0x1]
    %v2267 = vld [vmem:[#allocation7 + $0x23] sm:$0x1]
    %v2268 = vsel %vm145, %v2264, 0.0
    %2269 = vadd.xlane.f32.xlu0 %v2268
    %v2270 = vpop.xlane.xlu0 %2269
    %v2271 = vsel %vm145, %v2265, 0.0
    %2272 = vadd.xlane.f32.xlu0 %v2271
    %v2273 = vpop.xlane.xlu0 %2272
    %v2274 = vmul.f32 %v2270, %v1130
    %v2275 = vmul.f32 %v2273, %v1130
    %v2276 = vsub.f32 %v2264, %v2274
    %v2277 = vsub.f32 %v2265, %v2275
    %v2278 = vmul.f32 %v2276, %v2276
    %v2279 = vmul.f32 %v2277, %v2277
    %v2280 = vsel %vm145, %v2278, 0.0
    %2281 = vadd.xlane.f32.xlu0 %v2280
    %v2282 = vpop.xlane.xlu0 %2281
    %v2283 = vsel %vm145, %v2279, 0.0
    %2284 = vadd.xlane.f32.xlu0 %v2283
    %v2285 = vpop.xlane.xlu0 %2284
    %v2286 = vmul.f32 %v2282, %v1130
    %v2287 = vmul.f32 %v2285, %v1130
    %v2288 = vadd.f32 %v2286, 1e-05
    %v2289 = vadd.f32 %v2287, 1e-05
    %v2290 = vrsqrt.pop %v2288
    %v2291 = vmul.f32 %v2290, %v2288
    %v2292 = vmul.f32 %v2291, %v2290
    %v2293 = vmul.f32 0.5, %v2292
    %v2294 = vsub.f32 1.5, %v2293
    %v2295 = vmul.f32 %v2290, %v2294
    %vm2296 = vweird.f32 %v2288
    %vm2297 = vweird.f32 %v2290
    %vm2298 = vmor %vm2296, %vm2297
    %v2299 = vsel %vm2298, %v2290, %v2295
    %v2300 = vrsqrt.pop %v2289
    %v2301 = vmul.f32 %v2300, %v2289
    %v2302 = vmul.f32 %v2301, %v2300
    %v2303 = vmul.f32 0.5, %v2302
    %v2304 = vsub.f32 1.5, %v2303
    %v2305 = vmul.f32 %v2300, %v2304
    %vm2306 = vweird.f32 %v2289
    %vm2307 = vweird.f32 %v2300
    %vm2308 = vmor %vm2306, %vm2307
    %v2309 = vsel %vm2308, %v2300, %v2305
    %v2310 = vmul.f32 %v2276, %v2299
    %v2311 = vmul.f32 %v2277, %v2309
    %v2312 = vperm.slane %v2266, 0
    %v2313 = vmul.f32 %v2310, %v2312
    %v2314 = vmul.f32 %v2311, %v2312
    %v2315 = vperm.slane %v2267, 0
    %v2316 = vadd.f32 %v2313, %v2315
    %v2317 = vadd.f32 %v2314, %v2315
    %v2318 = vld [vmem:[#allocation7 + $0x28] sm:$0xff]
    %v2319 = vld [vmem:[#allocation7 + $0x30] sm:$0xff]
    %v2320 = vld [vmem:[#allocation7 + $0x38] sm:$0xff]
    %v2321 = vld [vmem:[#allocation7 + $0x40] sm:$0xff]
    %v2322 = vld [vmem:[#allocation7 + $0x48] sm:$0xff]
    %v2323 = vld [vmem:[#allocation7 + $0x64] sm:$0x1]
    %v2324 = vperm.slane %v2323, 0
    %v2326 = vsel %vm145, %v2316, 0
    %v2329 = vsel %vm145, %v2317, 0
    %2331 = vmatpush.msra.mxu0 0.0
    %2332 = vmatpush.msra.mxu0 0.0
    %2333 = vmatpush.msra.mxu0 0.0
    %2334 = vmatpush.msra.mxu0 0.0
    %2335 = vmatpush.msra.mxu0 0.0
    %2336 = vmatpush.msra.mxu0 0.0
    %2337 = vmatpush.msra.mxu0 0.0
    %2338 = vmatpush.msra.mxu0 0.0
    %2339 = vmatpush.msra.mxu0 0.0
    %2340 = vmatpush.msra.mxu0 0.0
    %2341 = vmatpush.msra.mxu0 0.0
    %2342 = vmatpush.msra.mxu0 %v2322
    %2343 = vmatpush.msra.mxu0 %v2321
    %2344 = vmatpush.msra.mxu0 %v2320
    %2345 = vmatpush.msra.mxu0 %v2319
    %2346 = vmatpush.msra.mxu0 %v2318
    %2347 = vmatmul.f32.gmra.mxu0 %v2326
    %v2348 = vpop.f32.mrf.mxu0
    %v2349 = vadd.f32 %v2324, %v2348
    %2350 = vmatmul.f32.gmra.mxu0 %v2329
    %v2351 = vpop.f32.mrf.mxu0
    %v2352 = vadd.f32 %v2324, %v2351
    %2353 = vdwg.mxu0
    %v2354 = vmax.f32 %v2349, 0.0
    %v2355 = vmax.f32 %v2352, 0.0
    %v2356 = vld [vmem:[#allocation7 + $0x50] sm:$0xff]
    %v2357 = vld [vmem:[#allocation7 + $0x58] sm:$0xff]
    %v2358 = vld [vmem:[#allocation7 + $0x60] sm:$0xf]
    %v2359 = vld [vmem:[#allocation7 + $0x65] sm:$0x1]
    %v2360 = vperm.slane %v2359, 0
    %vm2361 = vcmask 162816
    %v2363 = vsel %vm2361, %v2354, 0
    %v2366 = vsel %vm2361, %v2355, 0
    %v2369 = vsel %vm1459, %v2358, 0
    %2371 = vmatpush.msra.mxu0 0.0
    %2372 = vmatpush.msra.mxu0 0.0
    %2373 = vmatpush.msra.mxu0 0.0
    %2374 = vmatpush.msra.mxu0 0.0
    %2375 = vmatpush.msra.mxu0 0.0
    %2376 = vmatpush.msra.mxu0 0.0
    %2377 = vmatpush.msra.mxu0 0.0
    %2378 = vmatpush.msra.mxu0 0.0
    %2379 = vmatpush.msra.mxu0 0.0
    %2380 = vmatpush.msra.mxu0 0.0
    %2381 = vmatpush.msra.mxu0 0.0
    %2382 = vmatpush.msra.mxu0 0.0
    %2383 = vmatpush.msra.mxu0 0.0
    %2384 = vmatpush.msra.mxu0 %v2369
    %2385 = vmatpush.msra.mxu0 %v2357
    %2386 = vmatpush.msra.mxu0 %v2356
    %2387 = vmatmul.f32.gmra.mxu0 %v2363
    %v2388 = vpop.f32.mrf.mxu0
    %v2389 = vadd.f32 %v2360, %v2388
    %2390 = vmatmul.f32.gmra.mxu0 %v2366
    %v2391 = vpop.f32.mrf.mxu0
    %v2392 = vadd.f32 %v2360, %v2391
    %2393 = vdwg.mxu0
    %v2394 = vmax.f32 %v2389, 0.0
    %v2395 = vmax.f32 %v2392, 0.0
    %v2396 = vld [vmem:[#allocation7 + $0x66] sm:$0x1]
    %v2397 = vperm.slane %v2396, 0
    %v2398 = vmul.f32 %v2394, %v2397
    %v2399 = vmul.f32 %v2395, %v2397
    %vm2400 = vcmask 80896
    %v2401 = vsel %vm2400, %v2398, 0.0
    %2402 = vadd.xlane.f32.xlu0 %v2401
    %v2403 = vpop.xlane.xlu0 %2402
    %v2404 = vsel %vm2400, %v2399, 0.0
    %2405 = vadd.xlane.f32.xlu0 %v2404
    %v2406 = vpop.xlane.xlu0 %2405
    %v2407 = vld [vmem:[#allocation7 + $0x67] sm:$0x1]
    %v2408 = vperm.slane %v2407, 0
    %v2409 = vadd.f32 %v2403, %v2408
    %v2410 = vadd.f32 %v2406, %v2408
    %vm2411 = vcmask 7168
    %2412 = vst.msk [vmem:[%s6] sm:$0xff] %vm2411, %v2409
    %2413 = vst.msk [vmem:[%s6 + $0x8] sm:$0xff] %vm2411, %v2410
    // Predicated region
    $region42: #{tpu_custom_call.1} parent=1 // pred_check
      _
    $region43: #{tpu_custom_call.1} parent=1 // pred_check_branch
      %2415 = sbr.rel (0) target = $region45
    $region44: #{tpu_custom_call.1} parent=1 // pred_region
      _
    $region45: #{tpu_custom_call.1} parent=1 // pred_fallthru
      _
    // Predicated region
    $region46: #{tpu_custom_call.1} parent=1 // pred_check
      _
    $region47: #{tpu_custom_call.1} parent=1 // pred_check_branch
      %2417 = sbr.rel (0) target = $region49
    $region48: #{tpu_custom_call.1} parent=1 // pred_region
      _
    $region49: #{tpu_custom_call.1} parent=1 // pred_fallthru
      _
    %2418 = vsyncpa [#allocation6], 1
    %2419 = vsyncpa [#allocation8], 1
    %2420 = vsyncpa [#allocation11], 1
  %2421 = vsyncmov [#allocation4]
  %s2422 = vpop.sfrf %2421
  %p2423 = scmp.eq.s32.totalorder %s2422, 0
  %p2424 = pneg %p2423
  %2426 = shalt.err (%p2424)
  %s2427 = scalar_lea.sflag [#allocation4], 1
  %2428 = vsyncmov %s2427
  %s2429 = vpop.sfrf %2428
  %p2430 = scmp.eq.s32.totalorder %s2429, 0
  %p2431 = pneg %p2430
  %2433 = shalt.err (%p2431)

</llo_original>
